<compile_context>
chip_gen: v5e
topology: v5e:2x2
jax: 0.10.0
libtpu: 0.0.40
codegen_flags: <defaults>
</compile_context>

<pallas_src>
from functools import partial

import jax
import jax.numpy as jnp
from jax import lax
from jax.experimental import pallas as pl
from jax.experimental.pallas import tpu as pltpu

NUM_LAYERS = 2  # nn.LSTM(num_layers=2)


def _speller_kernel(word0_ref, ctx0_ref, lproj_ref,
                    w1_ref, b1_ref,
                    wih0_ref, whh0_ref, bl0_ref,
                    wl1_ref, bl1_ref,
                    wp_ref, bp_ref,
                    pred_ref, attn_ref,
                    word_sc, ctx_sc, h0_sc, c0_sc, h1_sc, c1_sc):
    t = pl.program_id(0)                      # decode step (grid axis, "arbitrary")
    B, T, ATT = lproj_ref.shape
    H = whh0_ref.shape[0]

    # ---- step 0: seed the carried decode state (persists across grid steps).
    @pl.when(t == 0)
    def _():
        word_sc[...] = word0_ref[...]
        ctx_sc[...] = ctx0_ref[...]
        z = jnp.zeros((1, H), jnp.float32)
        h0_sc[...] = z
        c0_sc[...] = z
        h1_sc[...] = z
        c1_sc[...] = z

    # Step-invariant weights / projected listener: whole-array VMEM residents,
    # DMA'd from HBM exactly once for the whole decode (single-buffered).
    w1 = w1_ref[...]
    b1 = b1_ref[...]
    wih0 = wih0_ref[...]
    whh0 = whh0_ref[...]
    bl0 = bl0_ref[...]
    wl1 = wl1_ref[...]
    bl1 = bl1_ref[...]
    wp = wp_ref[...]
    bp = bp_ref[...]
    lproj = lproj_ref[...]                    # (B, T, ATT) bf16 = relu(listener@W2+b2)

    word = word_sc[...]                       # (B, LABEL) fed-back prediction
    ctx = ctx_sc[...]                         # (B, ATT)   fed-back attention context
    h0 = h0_sc[...]
    c0 = c0_sc[...]
    h1 = h1_sc[...]
    c1 = c1_sc[...]

    def _cell(gates, c_prev):
        i = jax.nn.sigmoid(gates[:, 0:H])
        f = jax.nn.sigmoid(gates[:, H:2 * H])
        g = jnp.tanh(gates[:, 2 * H:3 * H])
        o = jax.nn.sigmoid(gates[:, 3 * H:4 * H])
        c_new = f * c_prev + i * g
        return o * jnp.tanh(c_new), c_new

    # Carry-independent layer-0 input pre-activation: one batched MXU matmul,
    # kept in registers (no VMEM round trip, hoisted out of the serial scan).
    pre = (jnp.dot(jnp.concatenate([word, ctx], axis=-1), wih0,
                   preferred_element_type=jnp.float32) + bl0)          # (B, 4H)

    row4 = lax.broadcasted_iota(jnp.int32, (B, 4 * H), 0)
    rowH = lax.broadcasted_iota(jnp.int32, (B, H), 0)

    # PyTorch quirk: nn.LSTM(batch_first=False) sees the (B, 1, D) rnn_input as
    # a length-B sequence with batch=1, so (h, c) is carried *serially across
    # batch elements*.  Do NOT batch the recurrent matmuls over B.
    def lstm_body(b, carry):
        h0, c0, h1, c1, out = carry
        pre_b = jnp.sum(jnp.where(row4 == b, pre, 0.0),
                        axis=0, keepdims=True)                         # (1, 4H)
        g0 = pre_b + jnp.dot(h0, whh0, preferred_element_type=jnp.float32)
        h0n, c0n = _cell(g0, c0)
        # fused layer-1 recurrence: single MXU push for [W_ih1; W_hh1]
        g1 = (jnp.dot(jnp.concatenate([h0n, h1], axis=-1), wl1,
                      preferred_element_type=jnp.float32) + bl1)
        h1n, c1n = _cell(g1, c1)
        out = jnp.where(rowH == b, h1n, out)                           # register scatter
        return (h0n, c0n, h1n, c1n, out)

    h0, c0, h1, c1, lstm_out = lax.fori_loop(
        0, B, lstm_body,
        (h0, c0, h1, c1, jnp.zeros((B, H), jnp.float32)),
        unroll=min(B, 8))

    # ---- Attention: batched bf16 MXU einsums, f32 accumulation.
    d_proj = jnp.maximum(
        jnp.dot(lstm_out, w1, preferred_element_type=jnp.float32) + b1, 0.0)
    energy = jnp.einsum('bqa,bta->bqt',
                        d_proj[:, None, :].astype(lproj.dtype), lproj,
                        preferred_element_type=jnp.float32)            # (B, 1, T)
    e_exp = jnp.exp(energy - jnp.max(energy, axis=-1, keepdims=True))
    # exact divide: the softmax output re-enters the recurrence every step.
    score3 = e_exp / jnp.sum(e_exp, axis=-1, keepdims=True)            # (B, 1, T)
    context = jnp.einsum('bqt,bta->bqa', score3.astype(lproj.dtype), lproj,
                         preferred_element_type=jnp.float32)[:, 0, :]  # (B, ATT)
    score = score3[:, 0, :]                                            # (B, T)

    # ---- prediction head: fused Linear([lstm_out, context]) + LogSoftmax.
    logits = (jnp.dot(jnp.concatenate([lstm_out, context], axis=-1), wp,
                      preferred_element_type=jnp.float32) + bp)        # (B, LABEL)
    l_shift = logits - jnp.max(logits, axis=-1, keepdims=True)
    log_pred = l_shift - jnp.log(jnp.sum(jnp.exp(l_shift), axis=-1, keepdims=True))

    # Per-step output blocks: writeback DMA is pipelined across the S grid axis.
    pred_ref[...] = log_pred[None]
    attn_ref[...] = score[None]

    # label=None path: feed the prediction and attention context to step t+1.
    word_sc[...] = log_pred
    ctx_sc[...] = context
    h0_sc[...] = h0
    c0_sc[...] = c0
    h1_sc[...] = h1
    c1_sc[...] = c1


def _padded_bytes(shape, itemsize, sublane=8):
    """Approximate VMEM footprint of one buffer, padded to (sublane, 128)."""
    s = (1, 1) + tuple(int(d) for d in shape)
    lead = 1
    for d in s[:-2]:
        lead *= d
    sub = -(-s[-2] // sublane) * sublane
    lane = -(-s[-1] // 128) * 128
    return lead * sub * lane * itemsize


@partial(jax.jit, static_argnums=(3,))
def speller_forward(listener, onehot0, params, max_time_step):
    (w1_t, b1, w2_t, b2,
     wih0_t, whh0_t, bl0,
     wl1_t, bl1,
     wp_t, bp) = params

    B, T, F = listener.shape
    LABEL = onehot0.shape[-1]
    H = whh0_t.shape[0]
    ATT = w1_t.shape[1]
    S = max_time_step

    # The original module only type-checks when 2*listener_hidden ==
    # speller_hidden == output_size_attention (concatenations + linear dims).
    assert F == H and ATT == H, "Speller requires listener_feat == hidden == attention dims"

    # Step-invariant listener projection, hoisted out of the decode loop (plain
    # XLA -> can use both TensorCores on v7x).  Stored bf16 to halve the
    # dominant VMEM buffer; it is only used as an MXU operand inside the kernel.
    l_proj = jnp.maximum(jnp.einsum('btf,fa->bta', listener, w2_t) + b2[0],
                         0.0).astype(jnp.bfloat16)
    ctx0 = listener[:, 0, :]                  # raw listener frame 0 = initial context
    word0 = onehot0.reshape(B, LABEL)         # OneHot(zeros)

    # VMEM budget from actual buffer sizes (+headroom), capped for v7x (64 MiB).
    buf_bytes = (
        _padded_bytes((B, LABEL), 4) + _padded_bytes((B, H), 4)              # word0, ctx0
        + _padded_bytes((B, T, ATT), 2, sublane=16)                          # lproj (bf16)
        + _padded_bytes((H, ATT), 4) + _padded_bytes((1, ATT), 4)            # attention linear1
        + _padded_bytes((LABEL + H, 4 * H), 4)                               # fused lstm l0 W_ih
        + _padded_bytes((H, 4 * H), 4) + _padded_bytes((1, 4 * H), 4)        # lstm l0 W_hh, bias
        + _padded_bytes((2 * H, 4 * H), 4) + _padded_bytes((1, 4 * H), 4)    # fused lstm l1 W, bias
        + _padded_bytes((2 * H, LABEL), 4) + _padded_bytes((1, LABEL), 4)    # fused head W, bias
        + 2 * _padded_bytes((1, B, LABEL), 4) + 2 * _padded_bytes((1, B, T), 4)  # out blocks (dbl-buf)
        + _padded_bytes((B, LABEL), 4) + _padded_bytes((B, ATT), 4)          # carried word/ctx
        + 4 * _padded_bytes((1, H), 4)                                       # carried h/c
    )
    vmem_limit = int(min(max(2 * buf_bytes + (8 << 20), 32 << 20), 56 << 20))

    # Step-invariant inputs: whole-array VMEM residents (single-buffered,
    # loaded from HBM once; no per-step re-DMA, no useless double buffer).
    resident = [pl.BlockSpec(memory_space=pltpu.MemorySpace.VMEM) for _ in range(12)]

    grid_spec = pltpu.PrefetchScalarGridSpec(
        num_scalar_prefetch=0,
        grid=(S,),                                        # one grid step per decode step
        in_specs=resident,
        out_specs=[
            pl.BlockSpec((1, B, LABEL), lambda s: (s, 0, 0)),
            pl.BlockSpec((1, B, T), lambda s: (s, 0, 0)),
        ],
        scratch_shapes=[
            pltpu.VMEM((B, LABEL), jnp.float32),          # carried fed-back word
            pltpu.VMEM((B, ATT), jnp.float32),            # carried attention context
            pltpu.VMEM((1, H), jnp.float32),              # carried h (layer 0)
            pltpu.VMEM((1, H), jnp.float32),              # carried c (layer 0)
            pltpu.VMEM((1, H), jnp.float32),              # carried h (layer 1)
            pltpu.VMEM((1, H), jnp.float32),              # carried c (layer 1)
        ],
    )

    pred_seq, attn_seq = pl.pallas_call(
        _speller_kernel,
        out_shape=(jax.ShapeDtypeStruct((S, B, LABEL), jnp.float32),
                   jax.ShapeDtypeStruct((S, B, T), jnp.float32)),
        grid_spec=grid_spec,
        compiler_params=pltpu.CompilerParams(
            dimension_semantics=("arbitrary",),           # state carried across steps
            vmem_limit_bytes=vmem_limit),
    )(word0, ctx0, l_proj,
      w1_t, b1,
      wih0_t, whh0_t, bl0,
      wl1_t, bl1,
      wp_t, bp)

    # torch.stack(predictions).transpose(0, 1) -> (B, max_time_step, LABEL)
    return jnp.transpose(pred_seq, (1, 0, 2)), attn_seq


def init_params(key, label_dim, H, att, listener_feat):
    ks = jax.random.split(key, 14)
    s = 0.1
    rn = lambda k, shape: jax.random.normal(k, shape, jnp.float32) * s
    # PyTorch parameter shapes
    w1 = rn(ks[0], (att, listener_feat)); b1 = rn(ks[1], (att,))
    w2 = rn(ks[2], (att, listener_feat)); b2 = rn(ks[3], (att,))
    wih0 = rn(ks[4], (4 * H, label_dim + H)); whh0 = rn(ks[5], (4 * H, H))
    bih0 = rn(ks[6], (4 * H,)); bhh0 = rn(ks[7], (4 * H,))
    wih1 = rn(ks[8], (4 * H, H)); whh1 = rn(ks[9], (4 * H, H))
    bih1 = rn(ks[10], (4 * H,)); bhh1 = rn(ks[11], (4 * H,))
    wp = rn(ks[12], (label_dim, 2 * H)); bp = rn(ks[13], (label_dim,))
    # kernel layout: transposed (in, out); fused layer-1 / head weights;
    # LSTM biases pre-summed; biases as (1, dim)
    wih0_t = wih0.T                                     # (label+H, 4H): rows [word | ctx]
    wl1_t = jnp.concatenate([wih1.T, whh1.T], axis=0)   # (2H, 4H): rows [h0_in | h1_prev]
    wp_t = wp.T                                         # (2H, label): rows [lstm_out | context]
    return (w1.T, b1[None, :], w2.T, b2[None, :],
            wih0_t, whh0.T, (bih0 + bhh0)[None, :],
            wl1_t, (bih1 + bhh1)[None, :],
            wp_t, bp[None, :])


def speller_reference(listener, onehot0, params, max_time_step):
    """Pure-JAX f32 reference with identical semantics (for verification)."""
    (w1_t, b1, w2_t, b2,
     wih0_t, whh0_t, bl0,
     wl1_t, bl1,
     wp_t, bp) = params
    B, T, F = listener.shape
    H = whh0_t.shape[0]
    sig = lambda x: 1.0 / (1.0 + jnp.exp(-x))
    l_proj = jnp.maximum(jnp.einsum('btf,fa->bta', listener, w2_t) + b2[0], 0.0)
    word = onehot0[:, 0, :]
    ctx = listener[:, 0, :]
    h = jnp.zeros((NUM_LAYERS, H), jnp.float32)
    c = jnp.zeros((NUM_LAYERS, H), jnp.float32)
    preds, attns = [], []
    for _ in range(max_time_step):
        outs = []
        for b in range(B):
            g0 = jnp.concatenate([word[b], ctx[b]]) @ wih0_t + h[0] @ whh0_t + bl0[0]
            i0, f0 = sig(g0[:H]), sig(g0[H:2 * H])
            gg0, o0 = jnp.tanh(g0[2 * H:3 * H]), sig(g0[3 * H:])
            c0 = f0 * c[0] + i0 * gg0; h0 = o0 * jnp.tanh(c0)
            g1 = jnp.concatenate([h0, h[1]]) @ wl1_t + bl1[0]
            i1, f1 = sig(g1[:H]), sig(g1[H:2 * H])
            gg1, o1 = jnp.tanh(g1[2 * H:3 * H]), sig(g1[3 * H:])
            c1 = f1 * c[1] + i1 * gg1; h1 = o1 * jnp.tanh(c1)
            h = jnp.stack([h0, h1]); c = jnp.stack([c0, c1])
            outs.append(h1)
        lstm_out = jnp.stack(outs)
        d_proj = jnp.maximum(lstm_out @ w1_t + b1[0], 0.0)
        energy = jnp.einsum('ba,bta->bt', d_proj, l_proj)
        score = jax.nn.softmax(energy, axis=-1)
        context = jnp.einsum('bt,bta->ba', score, l_proj)
        logits = jnp.concatenate([lstm_out, context], axis=-1) @ wp_t + bp[0]
        pred = jax.nn.log_softmax(logits, axis=-1)
        preds.append(pred); attns.append(score)
        word = pred; ctx = context
    return jnp.stack(preds, axis=1), jnp.stack(attns, axis=0)


if __name__ == "__main__":
    # sizes consistent with the module: speller_hidden = output_size_attention
    # = 2 * listener_hidden  (required by the original code's cats / linears)
    B, T = 2, 8
    LISTEN_H = 16
    F = 2 * LISTEN_H          # listener feature dim = 32
    H = 32                    # speller_hidden_dim
    ATT = 32                  # output_size_attention
    LABEL = 16                # output_class_dim
    MAX_STEPS = 4

    key = jax.random.PRNGKey(0)
    k_listener, k_params = jax.random.split(key)
    listener = jax.random.normal(k_listener, (B, T, F), jnp.float32) * 0.5
    params = init_params(k_params, LABEL, H, ATT, F)
    # OneHot(zeros) -> index-0 one-hot, shape (B, 1, LABEL)
    onehot0 = jnp.zeros((B, 1, LABEL), jnp.float32).at[:, :, 0].set(1.0)

    preds, attns = speller_forward(listener, onehot0, params, MAX_STEPS)
    jax.block_until_ready((preds, attns))

    ref_p, ref_a = speller_reference(listener, onehot0, params, MAX_STEPS)
    ok = (jnp.allclose(preds, ref_p, rtol=2e-2, atol=2e-2)
          and jnp.allclose(attns, ref_a, rtol=2e-2, atol=2e-2))
    if not bool(ok):
        raise AssertionError("Pallas kernel does not match reference")
    print("KERNEL_OK")
</pallas_src>

<mosaic_0001>
module attributes {stable_mosaic.version = 11 : i64} {
  func.func @_speller_kernel(%arg0: i32, %arg1: memref<2x16xf32, #tpu.memory_space<vmem>>, %arg2: memref<2x32xf32, #tpu.memory_space<vmem>>, %arg3: memref<2x8x32xbf16, #tpu.memory_space<vmem>>, %arg4: memref<32x32xf32, #tpu.memory_space<vmem>>, %arg5: memref<1x32xf32, #tpu.memory_space<vmem>>, %arg6: memref<48x128xf32, #tpu.memory_space<vmem>>, %arg7: memref<32x128xf32, #tpu.memory_space<vmem>>, %arg8: memref<1x128xf32, #tpu.memory_space<vmem>>, %arg9: memref<64x128xf32, #tpu.memory_space<vmem>>, %arg10: memref<1x128xf32, #tpu.memory_space<vmem>>, %arg11: memref<64x16xf32, #tpu.memory_space<vmem>>, %arg12: memref<1x16xf32, #tpu.memory_space<vmem>>, %arg13: memref<1x2x16xf32, #tpu.memory_space<vmem>>, %arg14: memref<1x2x8xf32, #tpu.memory_space<vmem>>, %arg15: memref<2x16xf32, #tpu.memory_space<vmem>>, %arg16: memref<2x32xf32, #tpu.memory_space<vmem>>, %arg17: memref<1x32xf32, #tpu.memory_space<vmem>>, %arg18: memref<1x32xf32, #tpu.memory_space<vmem>>, %arg19: memref<1x32xf32, #tpu.memory_space<vmem>>, %arg20: memref<1x32xf32, #tpu.memory_space<vmem>>) attributes {dimension_semantics = [#tpu.dimension_semantics<arbitrary>], iteration_bounds = array<i64: 4>, scalar_prefetch = 0 : i64, scratch_operands = 6 : i64, tpu.core_type = #tpu.core_type<tc>, window_params = [{pipeline_mode = #tpu.pipeline_mode<synchronous>, transform_indices = @transform_0, window_bounds = array<i64: 2, 16>}, {pipeline_mode = #tpu.pipeline_mode<synchronous>, transform_indices = @transform_1, window_bounds = array<i64: 2, 32>}, {pipeline_mode = #tpu.pipeline_mode<synchronous>, transform_indices = @transform_2, window_bounds = array<i64: 2, 8, 32>}, {pipeline_mode = #tpu.pipeline_mode<synchronous>, transform_indices = @transform_3, window_bounds = array<i64: 32, 32>}, {pipeline_mode = #tpu.pipeline_mode<synchronous>, transform_indices = @transform_4, window_bounds = array<i64: 1, 32>}, {pipeline_mode = #tpu.pipeline_mode<synchronous>, transform_indices = @transform_5, window_bounds = array<i64: 48, 128>}, {pipeline_mode = #tpu.pipeline_mode<synchronous>, transform_indices = @transform_6, window_bounds = array<i64: 32, 128>}, {pipeline_mode = #tpu.pipeline_mode<synchronous>, transform_indices = @transform_7, window_bounds = array<i64: 1, 128>}, {pipeline_mode = #tpu.pipeline_mode<synchronous>, transform_indices = @transform_8, window_bounds = array<i64: 64, 128>}, {pipeline_mode = #tpu.pipeline_mode<synchronous>, transform_indices = @transform_9, window_bounds = array<i64: 1, 128>}, {pipeline_mode = #tpu.pipeline_mode<synchronous>, transform_indices = @transform_10, window_bounds = array<i64: 64, 16>}, {pipeline_mode = #tpu.pipeline_mode<synchronous>, transform_indices = @transform_11, window_bounds = array<i64: 1, 16>}, {transform_indices = @transform_12, window_bounds = array<i64: 1, 2, 16>}, {transform_indices = @transform_13, window_bounds = array<i64: 1, 2, 8>}]} {
    %c0_i32 = arith.constant 0 : i32
    %0 = arith.cmpi eq, %arg0, %c0_i32 : i32
    %1 = arith.extui %0 : i1 to i32
    %c0_i32_0 = arith.constant 0 : i32
    %2 = arith.cmpi ne, %1, %c0_i32_0 : i32
    scf.if %2 {
      %c0_82 = arith.constant 0 : index
      %c0_83 = arith.constant 0 : index
      %203 = vector.load %arg1[%c0_82, %c0_83] : memref<2x16xf32, #tpu.memory_space<vmem>>, vector<2x16xf32>
      %c0_84 = arith.constant 0 : index
      %c0_85 = arith.constant 0 : index
      %204 = vector.load %arg15[%c0_84, %c0_85] : memref<2x16xf32, #tpu.memory_space<vmem>>, vector<2x16xf32>
      tpu.vector_store %arg15[%c0_84, %c0_85], %203 {strides = array<i32>} : memref<2x16xf32, #tpu.memory_space<vmem>>, vector<2x16xf32>,
      %c0_86 = arith.constant 0 : index
      %c0_87 = arith.constant 0 : index
      %205 = vector.load %arg2[%c0_86, %c0_87] : memref<2x32xf32, #tpu.memory_space<vmem>>, vector<2x32xf32>
      %c0_88 = arith.constant 0 : index
      %c0_89 = arith.constant 0 : index
      %206 = vector.load %arg16[%c0_88, %c0_89] : memref<2x32xf32, #tpu.memory_space<vmem>>, vector<2x32xf32>
      tpu.vector_store %arg16[%c0_88, %c0_89], %205 {strides = array<i32>} : memref<2x32xf32, #tpu.memory_space<vmem>>, vector<2x32xf32>,
      %cst_90 = arith.constant 0.000000e+00 : f32
      %207 = vector.broadcast %cst_90 : f32 to vector<1x32xf32>
      %c0_91 = arith.constant 0 : index
      %c0_92 = arith.constant 0 : index
      %208 = vector.load %arg17[%c0_91, %c0_92] : memref<1x32xf32, #tpu.memory_space<vmem>>, vector<1x32xf32>
      tpu.vector_store %arg17[%c0_91, %c0_92], %207 {strides = array<i32>} : memref<1x32xf32, #tpu.memory_space<vmem>>, vector<1x32xf32>,
      %c0_93 = arith.constant 0 : index
      %c0_94 = arith.constant 0 : index
      %209 = vector.load %arg18[%c0_93, %c0_94] : memref<1x32xf32, #tpu.memory_space<vmem>>, vector<1x32xf32>
      tpu.vector_store %arg18[%c0_93, %c0_94], %207 {strides = array<i32>} : memref<1x32xf32, #tpu.memory_space<vmem>>, vector<1x32xf32>,
      %c0_95 = arith.constant 0 : index
      %c0_96 = arith.constant 0 : index
      %210 = vector.load %arg19[%c0_95, %c0_96] : memref<1x32xf32, #tpu.memory_space<vmem>>, vector<1x32xf32>
      tpu.vector_store %arg19[%c0_95, %c0_96], %207 {strides = array<i32>} : memref<1x32xf32, #tpu.memory_space<vmem>>, vector<1x32xf32>,
      %c0_97 = arith.constant 0 : index
      %c0_98 = arith.constant 0 : index
      %211 = vector.load %arg20[%c0_97, %c0_98] : memref<1x32xf32, #tpu.memory_space<vmem>>, vector<1x32xf32>
      tpu.vector_store %arg20[%c0_97, %c0_98], %207 {strides = array<i32>} : memref<1x32xf32, #tpu.memory_space<vmem>>, vector<1x32xf32>,
    } else {
    }
    %c0 = arith.constant 0 : index
    %c0_1 = arith.constant 0 : index
    %3 = vector.load %arg4[%c0, %c0_1] : memref<32x32xf32, #tpu.memory_space<vmem>>, vector<32x32xf32>
    %c0_2 = arith.constant 0 : index
    %c0_3 = arith.constant 0 : index
    %4 = vector.load %arg5[%c0_2, %c0_3] : memref<1x32xf32, #tpu.memory_space<vmem>>, vector<1x32xf32>
    %c0_4 = arith.constant 0 : index
    %c0_5 = arith.constant 0 : index
    %5 = vector.load %arg6[%c0_4, %c0_5] : memref<48x128xf32, #tpu.memory_space<vmem>>, vector<48x128xf32>
    %c0_6 = arith.constant 0 : index
    %c0_7 = arith.constant 0 : index
    %6 = vector.load %arg7[%c0_6, %c0_7] : memref<32x128xf32, #tpu.memory_space<vmem>>, vector<32x128xf32>
    %c0_8 = arith.constant 0 : index
    %c0_9 = arith.constant 0 : index
    %7 = vector.load %arg8[%c0_8, %c0_9] : memref<1x128xf32, #tpu.memory_space<vmem>>, vector<1x128xf32>
    %c0_10 = arith.constant 0 : index
    %c0_11 = arith.constant 0 : index
    %8 = vector.load %arg9[%c0_10, %c0_11] : memref<64x128xf32, #tpu.memory_space<vmem>>, vector<64x128xf32>
    %c0_12 = arith.constant 0 : index
    %c0_13 = arith.constant 0 : index
    %9 = vector.load %arg10[%c0_12, %c0_13] : memref<1x128xf32, #tpu.memory_space<vmem>>, vector<1x128xf32>
    %c0_14 = arith.constant 0 : index
    %c0_15 = arith.constant 0 : index
    %10 = vector.load %arg11[%c0_14, %c0_15] : memref<64x16xf32, #tpu.memory_space<vmem>>, vector<64x16xf32>
    %c0_16 = arith.constant 0 : index
    %c0_17 = arith.constant 0 : index
    %11 = vector.load %arg12[%c0_16, %c0_17] : memref<1x16xf32, #tpu.memory_space<vmem>>, vector<1x16xf32>
    %c0_18 = arith.constant 0 : index
    %c0_19 = arith.constant 0 : index
    %c0_20 = arith.constant 0 : index
    %12 = vector.load %arg3[%c0_18, %c0_19, %c0_20] : memref<2x8x32xbf16, #tpu.memory_space<vmem>>, vector<2x8x32xbf16>
    %c0_21 = arith.constant 0 : index
    %c0_22 = arith.constant 0 : index
    %13 = vector.load %arg15[%c0_21, %c0_22] : memref<2x16xf32, #tpu.memory_space<vmem>>, vector<2x16xf32>
    %c0_23 = arith.constant 0 : index
    %c0_24 = arith.constant 0 : index
    %14 = vector.load %arg16[%c0_23, %c0_24] : memref<2x32xf32, #tpu.memory_space<vmem>>, vector<2x32xf32>
    %c0_25 = arith.constant 0 : index
    %c0_26 = arith.constant 0 : index
    %15 = vector.load %arg17[%c0_25, %c0_26] : memref<1x32xf32, #tpu.memory_space<vmem>>, vector<1x32xf32>
    %c0_27 = arith.constant 0 : index
    %c0_28 = arith.constant 0 : index
    %16 = vector.load %arg18[%c0_27, %c0_28] : memref<1x32xf32, #tpu.memory_space<vmem>>, vector<1x32xf32>
    %c0_29 = arith.constant 0 : index
    %c0_30 = arith.constant 0 : index
    %17 = vector.load %arg19[%c0_29, %c0_30] : memref<1x32xf32, #tpu.memory_space<vmem>>, vector<1x32xf32>
    %c0_31 = arith.constant 0 : index
    %c0_32 = arith.constant 0 : index
    %18 = vector.load %arg20[%c0_31, %c0_32] : memref<1x32xf32, #tpu.memory_space<vmem>>, vector<1x32xf32>
    %19 = tpu.concatenate %13, %14 in 1 : vector<2x16xf32>, vector<2x32xf32> -> vector<2x48xf32>
    %cst = arith.constant dense<0.000000e+00> : vector<2x128xf32>
    %20 = tpu.matmul %19, %5, %cst {dimension_numbers = #tpu.dot_dimension_numbers<[1], [0], [0], [1], [0, 0, 1, 1], [], []>} : vector<2x48xf32>, vector<48x128xf32>, vector<2x128xf32> -> vector<2x128xf32>
    %21 = vector.broadcast %7 : vector<1x128xf32> to vector<2x128xf32>
    %22 = arith.addf %20, %21 : vector<2x128xf32>
    %23 = tpu.iota {dimensions = array<i32: 0>} : vector<2x128xi32>
    %24 = tpu.iota {dimensions = array<i32: 0>} : vector<2x32xi32>
    %cst_33 = arith.constant 0.000000e+00 : f32
    %25 = vector.broadcast %cst_33 : f32 to vector<2x32xf32>
    %c0_i32_34 = arith.constant 0 : i32
    %26 = vector.broadcast %c0_i32_34 : i32 to vector<2x128xi32>
    %27 = arith.cmpi eq, %23, %26 : vector<2x128xi32>
    %cst_35 = arith.constant 0.000000e+00 : f32
    %28 = vector.broadcast %cst_35 : f32 to vector<2x128xf32>
    %29 = arith.select %27, %22, %28 : vector<2x128xi1>, vector<2x128xf32>
    %cst_36 = arith.constant dense<0.000000e+00> : vector<128xf32>
    %30 = vector.multi_reduction <add>, %29, %cst_36 [0] : vector<2x128xf32> to vector<128xf32>
    %31 = vector.shape_cast %30 : vector<128xf32> to vector<1x128xf32>
    %cst_37 = arith.constant dense<0.000000e+00> : vector<1x128xf32>
    %32 = tpu.matmul %15, %6, %cst_37 {dimension_numbers = #tpu.dot_dimension_numbers<[1], [0], [0], [1], [0, 0, 1, 1], [], []>} : vector<1x32xf32>, vector<32x128xf32>, vector<1x128xf32> -> vector<1x128xf32>
    %33 = arith.addf %31, %32 : vector<1x128xf32>
    %34 = vector.extract_strided_slice %33 {offsets = [0, 0], sizes = [1, 32], strides = [1, 1]} : vector<1x128xf32> to vector<1x32xf32>
    %35 = arith.negf %34 : vector<1x32xf32>
    %36 = math.exp %35 : vector<1x32xf32>
    %cst_38 = arith.constant 1.000000e+00 : f32
    %37 = vector.broadcast %cst_38 : f32 to vector<1x32xf32>
    %38 = arith.addf %37, %36 : vector<1x32xf32>
    %39 = arith.divf %37, %38 : vector<1x32xf32>
    %40 = vector.extract_strided_slice %33 {offsets = [0, 32], sizes = [1, 32], strides = [1, 1]} : vector<1x128xf32> to vector<1x32xf32>
    %41 = arith.negf %40 : vector<1x32xf32>
    %42 = math.exp %41 : vector<1x32xf32>
    %cst_39 = arith.constant 1.000000e+00 : f32
    %43 = vector.broadcast %cst_39 : f32 to vector<1x32xf32>
    %44 = arith.addf %43, %42 : vector<1x32xf32>
    %45 = arith.divf %43, %44 : vector<1x32xf32>
    %46 = vector.extract_strided_slice %33 {offsets = [0, 64], sizes = [1, 32], strides = [1, 1]} : vector<1x128xf32> to vector<1x32xf32>
    %47 = math.tanh %46 : vector<1x32xf32>
    %48 = vector.extract_strided_slice %33 {offsets = [0, 96], sizes = [1, 32], strides = [1, 1]} : vector<1x128xf32> to vector<1x32xf32>
    %49 = arith.negf %48 : vector<1x32xf32>
    %50 = math.exp %49 : vector<1x32xf32>
    %cst_40 = arith.constant 1.000000e+00 : f32
    %51 = vector.broadcast %cst_40 : f32 to vector<1x32xf32>
    %52 = arith.addf %51, %50 : vector<1x32xf32>
    %53 = arith.divf %51, %52 : vector<1x32xf32>
    %54 = arith.mulf %45, %16 : vector<1x32xf32>
    %55 = arith.mulf %39, %47 : vector<1x32xf32>
    %56 = arith.addf %54, %55 : vector<1x32xf32>
    %57 = math.tanh %56 : vector<1x32xf32>
    %58 = arith.mulf %53, %57 : vector<1x32xf32>
    %59 = tpu.concatenate %58, %17 in 1 : vector<1x32xf32>, vector<1x32xf32> -> vector<1x64xf32>
    %cst_41 = arith.constant dense<0.000000e+00> : vector<1x128xf32>
    %60 = tpu.matmul %59, %8, %cst_41 {dimension_numbers = #tpu.dot_dimension_numbers<[1], [0], [0], [1], [0, 0, 1, 1], [], []>} : vector<1x64xf32>, vector<64x128xf32>, vector<1x128xf32> -> vector<1x128xf32>
    %61 = arith.addf %60, %9 : vector<1x128xf32>
    %62 = vector.extract_strided_slice %61 {offsets = [0, 0], sizes = [1, 32], strides = [1, 1]} : vector<1x128xf32> to vector<1x32xf32>
    %63 = arith.negf %62 : vector<1x32xf32>
    %64 = math.exp %63 : vector<1x32xf32>
    %cst_42 = arith.constant 1.000000e+00 : f32
    %65 = vector.broadcast %cst_42 : f32 to vector<1x32xf32>
    %66 = arith.addf %65, %64 : vector<1x32xf32>
    %67 = arith.divf %65, %66 : vector<1x32xf32>
    %68 = vector.extract_strided_slice %61 {offsets = [0, 32], sizes = [1, 32], strides = [1, 1]} : vector<1x128xf32> to vector<1x32xf32>
    %69 = arith.negf %68 : vector<1x32xf32>
    %70 = math.exp %69 : vector<1x32xf32>
    %cst_43 = arith.constant 1.000000e+00 : f32
    %71 = vector.broadcast %cst_43 : f32 to vector<1x32xf32>
    %72 = arith.addf %71, %70 : vector<1x32xf32>
    %73 = arith.divf %71, %72 : vector<1x32xf32>
    %74 = vector.extract_strided_slice %61 {offsets = [0, 64], sizes = [1, 32], strides = [1, 1]} : vector<1x128xf32> to vector<1x32xf32>
    %75 = math.tanh %74 : vector<1x32xf32>
    %76 = vector.extract_strided_slice %61 {offsets = [0, 96], sizes = [1, 32], strides = [1, 1]} : vector<1x128xf32> to vector<1x32xf32>
    %77 = arith.negf %76 : vector<1x32xf32>
    %78 = math.exp %77 : vector<1x32xf32>
    %cst_44 = arith.constant 1.000000e+00 : f32
    %79 = vector.broadcast %cst_44 : f32 to vector<1x32xf32>
    %80 = arith.addf %79, %78 : vector<1x32xf32>
    %81 = arith.divf %79, %80 : vector<1x32xf32>
    %82 = arith.mulf %73, %18 : vector<1x32xf32>
    %83 = arith.mulf %67, %75 : vector<1x32xf32>
    %84 = arith.addf %82, %83 : vector<1x32xf32>
    %85 = math.tanh %84 : vector<1x32xf32>
    %86 = arith.mulf %81, %85 : vector<1x32xf32>
    %87 = vector.broadcast %c0_i32_34 : i32 to vector<2x32xi32>
    %88 = arith.cmpi eq, %24, %87 : vector<2x32xi32>
    %89 = vector.shape_cast %86 : vector<1x32xf32> to vector<1x32xf32>
    %90 = vector.broadcast %89 : vector<1x32xf32> to vector<2x32xf32>
    %91 = arith.select %88, %90, %25 : vector<2x32xi1>, vector<2x32xf32>
    %c1_i32 = arith.constant 1 : i32
    %92 = vector.broadcast %c1_i32 : i32 to vector<2x128xi32>
    %93 = arith.cmpi eq, %23, %92 : vector<2x128xi32>
    %cst_45 = arith.constant 0.000000e+00 : f32
    %94 = vector.broadcast %cst_45 : f32 to vector<2x128xf32>
    %95 = arith.select %93, %22, %94 : vector<2x128xi1>, vector<2x128xf32>
    %cst_46 = arith.constant dense<0.000000e+00> : vector<128xf32>
    %96 = vector.multi_reduction <add>, %95, %cst_46 [0] : vector<2x128xf32> to vector<128xf32>
    %97 = vector.shape_cast %96 : vector<128xf32> to vector<1x128xf32>
    %cst_47 = arith.constant dense<0.000000e+00> : vector<1x128xf32>
    %98 = tpu.matmul %58, %6, %cst_47 {dimension_numbers = #tpu.dot_dimension_numbers<[1], [0], [0], [1], [0, 0, 1, 1], [], []>} : vector<1x32xf32>, vector<32x128xf32>, vector<1x128xf32> -> vector<1x128xf32>
    %99 = arith.addf %97, %98 : vector<1x128xf32>
    %100 = vector.extract_strided_slice %99 {offsets = [0, 0], sizes = [1, 32], strides = [1, 1]} : vector<1x128xf32> to vector<1x32xf32>
    %101 = arith.negf %100 : vector<1x32xf32>
    %102 = math.exp %101 : vector<1x32xf32>
    %cst_48 = arith.constant 1.000000e+00 : f32
    %103 = vector.broadcast %cst_48 : f32 to vector<1x32xf32>
    %104 = arith.addf %103, %102 : vector<1x32xf32>
    %105 = arith.divf %103, %104 : vector<1x32xf32>
    %106 = vector.extract_strided_slice %99 {offsets = [0, 32], sizes = [1, 32], strides = [1, 1]} : vector<1x128xf32> to vector<1x32xf32>
    %107 = arith.negf %106 : vector<1x32xf32>
    %108 = math.exp %107 : vector<1x32xf32>
    %cst_49 = arith.constant 1.000000e+00 : f32
    %109 = vector.broadcast %cst_49 : f32 to vector<1x32xf32>
    %110 = arith.addf %109, %108 : vector<1x32xf32>
    %111 = arith.divf %109, %110 : vector<1x32xf32>
    %112 = vector.extract_strided_slice %99 {offsets = [0, 64], sizes = [1, 32], strides = [1, 1]} : vector<1x128xf32> to vector<1x32xf32>
    %113 = math.tanh %112 : vector<1x32xf32>
    %114 = vector.extract_strided_slice %99 {offsets = [0, 96], sizes = [1, 32], strides = [1, 1]} : vector<1x128xf32> to vector<1x32xf32>
    %115 = arith.negf %114 : vector<1x32xf32>
    %116 = math.exp %115 : vector<1x32xf32>
    %cst_50 = arith.constant 1.000000e+00 : f32
    %117 = vector.broadcast %cst_50 : f32 to vector<1x32xf32>
    %118 = arith.addf %117, %116 : vector<1x32xf32>
    %119 = arith.divf %117, %118 : vector<1x32xf32>
    %120 = arith.mulf %111, %56 : vector<1x32xf32>
    %121 = arith.mulf %105, %113 : vector<1x32xf32>
    %122 = arith.addf %120, %121 : vector<1x32xf32>
    %123 = math.tanh %122 : vector<1x32xf32>
    %124 = arith.mulf %119, %123 : vector<1x32xf32>
    %125 = tpu.concatenate %124, %86 in 1 : vector<1x32xf32>, vector<1x32xf32> -> vector<1x64xf32>
    %cst_51 = arith.constant dense<0.000000e+00> : vector<1x128xf32>
    %126 = tpu.matmul %125, %8, %cst_51 {dimension_numbers = #tpu.dot_dimension_numbers<[1], [0], [0], [1], [0, 0, 1, 1], [], []>} : vector<1x64xf32>, vector<64x128xf32>, vector<1x128xf32> -> vector<1x128xf32>
    %127 = arith.addf %126, %9 : vector<1x128xf32>
    %128 = vector.extract_strided_slice %127 {offsets = [0, 0], sizes = [1, 32], strides = [1, 1]} : vector<1x128xf32> to vector<1x32xf32>
    %129 = arith.negf %128 : vector<1x32xf32>
    %130 = math.exp %129 : vector<1x32xf32>
    %cst_52 = arith.constant 1.000000e+00 : f32
    %131 = vector.broadcast %cst_52 : f32 to vector<1x32xf32>
    %132 = arith.addf %131, %130 : vector<1x32xf32>
    %133 = arith.divf %131, %132 : vector<1x32xf32>
    %134 = vector.extract_strided_slice %127 {offsets = [0, 32], sizes = [1, 32], strides = [1, 1]} : vector<1x128xf32> to vector<1x32xf32>
    %135 = arith.negf %134 : vector<1x32xf32>
    %136 = math.exp %135 : vector<1x32xf32>
    %cst_53 = arith.constant 1.000000e+00 : f32
    %137 = vector.broadcast %cst_53 : f32 to vector<1x32xf32>
    %138 = arith.addf %137, %136 : vector<1x32xf32>
    %139 = arith.divf %137, %138 : vector<1x32xf32>
    %140 = vector.extract_strided_slice %127 {offsets = [0, 64], sizes = [1, 32], strides = [1, 1]} : vector<1x128xf32> to vector<1x32xf32>
    %141 = math.tanh %140 : vector<1x32xf32>
    %142 = vector.extract_strided_slice %127 {offsets = [0, 96], sizes = [1, 32], strides = [1, 1]} : vector<1x128xf32> to vector<1x32xf32>
    %143 = arith.negf %142 : vector<1x32xf32>
    %144 = math.exp %143 : vector<1x32xf32>
    %cst_54 = arith.constant 1.000000e+00 : f32
    %145 = vector.broadcast %cst_54 : f32 to vector<1x32xf32>
    %146 = arith.addf %145, %144 : vector<1x32xf32>
    %147 = arith.divf %145, %146 : vector<1x32xf32>
    %148 = arith.mulf %139, %84 : vector<1x32xf32>
    %149 = arith.mulf %133, %141 : vector<1x32xf32>
    %150 = arith.addf %148, %149 : vector<1x32xf32>
    %151 = math.tanh %150 : vector<1x32xf32>
    %152 = arith.mulf %147, %151 : vector<1x32xf32>
    %153 = vector.broadcast %c1_i32 : i32 to vector<2x32xi32>
    %154 = arith.cmpi eq, %24, %153 : vector<2x32xi32>
    %155 = vector.shape_cast %152 : vector<1x32xf32> to vector<1x32xf32>
    %156 = vector.broadcast %155 : vector<1x32xf32> to vector<2x32xf32>
    %157 = arith.select %154, %156, %91 : vector<2x32xi1>, vector<2x32xf32>
    %c2_i32 = arith.constant 2 : i32
    %cst_55 = arith.constant dense<0.000000e+00> : vector<2x32xf32>
    %158 = tpu.matmul %157, %3, %cst_55 {dimension_numbers = #tpu.dot_dimension_numbers<[1], [0], [0], [1], [0, 0, 1, 1], [], []>} : vector<2x32xf32>, vector<32x32xf32>, vector<2x32xf32> -> vector<2x32xf32>
    %159 = vector.broadcast %4 : vector<1x32xf32> to vector<2x32xf32>
    %160 = arith.addf %158, %159 : vector<2x32xf32>
    %cst_56 = arith.constant 0.000000e+00 : f32
    %161 = vector.broadcast %cst_56 : f32 to vector<2x32xf32>
    %162 = arith.maximumf %160, %161 : vector<2x32xf32>
    %163 = vector.shape_cast %162 : vector<2x32xf32> to vector<2x1x32xf32>
    %164 = arith.truncf %163 : vector<2x1x32xf32> to vector<2x1x32xbf16>
    "tpu.trace_start"() <{level = 10 : i32, message = "bqa,bta->bqt"}> : () -> ()
    %cst_57 = arith.constant dense<0.000000e+00> : vector<2x1x8xf32>
    %165 = tpu.matmul %164, %12, %cst_57 {dimension_numbers = #tpu.dot_dimension_numbers<[2], [2], [1], [1], [0, 0, 0, 1, 1, 1], [0], [0]>} : vector<2x1x32xbf16>, vector<2x8x32xbf16>, vector<2x1x8xf32> -> vector<2x1x8xf32>
    "tpu.trace_stop"() : () -> ()
    %cst_58 = arith.constant dense<0xFF800000> : vector<2x1xf32>
    %166 = vector.multi_reduction <maximumf>, %165, %cst_58 [2] : vector<2x1x8xf32> to vector<2x1xf32>
    %167 = vector.shape_cast %166 : vector<2x1xf32> to vector<2x1x1xf32>
    %168 = vector.broadcast %167 : vector<2x1x1xf32> to vector<2x1x8xf32>
    %169 = arith.subf %165, %168 : vector<2x1x8xf32>
    %170 = math.exp %169 : vector<2x1x8xf32>
    %cst_59 = arith.constant dense<0.000000e+00> : vector<2x1xf32>
    %171 = vector.multi_reduction <add>, %170, %cst_59 [2] : vector<2x1x8xf32> to vector<2x1xf32>
    %172 = vector.shape_cast %171 : vector<2x1xf32> to vector<2x1x1xf32>
    %173 = vector.broadcast %172 : vector<2x1x1xf32> to vector<2x1x8xf32>
    %174 = arith.divf %170, %173 : vector<2x1x8xf32>
    %175 = arith.truncf %174 : vector<2x1x8xf32> to vector<2x1x8xbf16>
    "tpu.trace_start"() <{level = 10 : i32, message = "bqt,bta->bqa"}> : () -> ()
    %cst_60 = arith.constant dense<0.000000e+00> : vector<2x1x32xf32>
    %176 = tpu.matmul %175, %12, %cst_60 {dimension_numbers = #tpu.dot_dimension_numbers<[2], [1], [1], [2], [0, 0, 0, 1, 1, 2], [0], [0]>} : vector<2x1x8xbf16>, vector<2x8x32xbf16>, vector<2x1x32xf32> -> vector<2x1x32xf32>
    "tpu.trace_stop"() : () -> ()
    %177 = vector.shape_cast %176 : vector<2x1x32xf32> to vector<2x32xf32>
    %178 = vector.shape_cast %174 : vector<2x1x8xf32> to vector<2x8xf32>
    %179 = tpu.concatenate %157, %177 in 1 : vector<2x32xf32>, vector<2x32xf32> -> vector<2x64xf32>
    %cst_61 = arith.constant dense<0.000000e+00> : vector<2x16xf32>
    %180 = tpu.matmul %179, %10, %cst_61 {dimension_numbers = #tpu.dot_dimension_numbers<[1], [0], [0], [1], [0, 0, 1, 1], [], []>} : vector<2x64xf32>, vector<64x16xf32>, vector<2x16xf32> -> vector<2x16xf32>
    %181 = vector.broadcast %11 : vector<1x16xf32> to vector<2x16xf32>
    %182 = arith.addf %180, %181 : vector<2x16xf32>
    %cst_62 = arith.constant dense<0xFF800000> : vector<2xf32>
    %183 = vector.multi_reduction <maximumf>, %182, %cst_62 [1] : vector<2x16xf32> to vector<2xf32>
    %184 = vector.shape_cast %183 : vector<2xf32> to vector<2x1xf32>
    %185 = vector.broadcast %184 : vector<2x1xf32> to vector<2x16xf32>
    %186 = arith.subf %182, %185 : vector<2x16xf32>
    %187 = math.exp %186 : vector<2x16xf32>
    %cst_63 = arith.constant dense<0.000000e+00> : vector<2xf32>
    %188 = vector.multi_reduction <add>, %187, %cst_63 [1] : vector<2x16xf32> to vector<2xf32>
    %189 = vector.shape_cast %188 : vector<2xf32> to vector<2x1xf32>
    %190 = math.log %189 : vector<2x1xf32>
    %191 = vector.broadcast %190 : vector<2x1xf32> to vector<2x16xf32>
    %192 = arith.subf %186, %191 : vector<2x16xf32>
    %193 = vector.shape_cast %192 : vector<2x16xf32> to vector<1x2x16xf32>
    %c0_64 = arith.constant 0 : index
    %c0_65 = arith.constant 0 : index
    %c0_66 = arith.constant 0 : index
    %194 = vector.load %arg13[%c0_64, %c0_65, %c0_66] : memref<1x2x16xf32, #tpu.memory_space<vmem>>, vector<1x2x16xf32>
    tpu.vector_store %arg13[%c0_64, %c0_65, %c0_66], %193 {strides = array<i32>} : memref<1x2x16xf32, #tpu.memory_space<vmem>>, vector<1x2x16xf32>,
    %195 = vector.shape_cast %178 : vector<2x8xf32> to vector<1x2x8xf32>
    %c0_67 = arith.constant 0 : index
    %c0_68 = arith.constant 0 : index
    %c0_69 = arith.constant 0 : index
    %196 = vector.load %arg14[%c0_67, %c0_68, %c0_69] : memref<1x2x8xf32, #tpu.memory_space<vmem>>, vector<1x2x8xf32>
    tpu.vector_store %arg14[%c0_67, %c0_68, %c0_69], %195 {strides = array<i32>} : memref<1x2x8xf32, #tpu.memory_space<vmem>>, vector<1x2x8xf32>,
    %c0_70 = arith.constant 0 : index
    %c0_71 = arith.constant 0 : index
    %197 = vector.load %arg15[%c0_70, %c0_71] : memref<2x16xf32, #tpu.memory_space<vmem>>, vector<2x16xf32>
    tpu.vector_store %arg15[%c0_70, %c0_71], %192 {strides = array<i32>} : memref<2x16xf32, #tpu.memory_space<vmem>>, vector<2x16xf32>,
    %c0_72 = arith.constant 0 : index
    %c0_73 = arith.constant 0 : index
    %198 = vector.load %arg16[%c0_72, %c0_73] : memref<2x32xf32, #tpu.memory_space<vmem>>, vector<2x32xf32>
    tpu.vector_store %arg16[%c0_72, %c0_73], %177 {strides = array<i32>} : memref<2x32xf32, #tpu.memory_space<vmem>>, vector<2x32xf32>,
    %c0_74 = arith.constant 0 : index
    %c0_75 = arith.constant 0 : index
    %199 = vector.load %arg17[%c0_74, %c0_75] : memref<1x32xf32, #tpu.memory_space<vmem>>, vector<1x32xf32>
    tpu.vector_store %arg17[%c0_74, %c0_75], %124 {strides = array<i32>} : memref<1x32xf32, #tpu.memory_space<vmem>>, vector<1x32xf32>,
    %c0_76 = arith.constant 0 : index
    %c0_77 = arith.constant 0 : index
    %200 = vector.load %arg18[%c0_76, %c0_77] : memref<1x32xf32, #tpu.memory_space<vmem>>, vector<1x32xf32>
    tpu.vector_store %arg18[%c0_76, %c0_77], %122 {strides = array<i32>} : memref<1x32xf32, #tpu.memory_space<vmem>>, vector<1x32xf32>,
    %c0_78 = arith.constant 0 : index
    %c0_79 = arith.constant 0 : index
    %201 = vector.load %arg19[%c0_78, %c0_79] : memref<1x32xf32, #tpu.memory_space<vmem>>, vector<1x32xf32>
    tpu.vector_store %arg19[%c0_78, %c0_79], %152 {strides = array<i32>} : memref<1x32xf32, #tpu.memory_space<vmem>>, vector<1x32xf32>,
    %c0_80 = arith.constant 0 : index
    %c0_81 = arith.constant 0 : index
    %202 = vector.load %arg20[%c0_80, %c0_81] : memref<1x32xf32, #tpu.memory_space<vmem>>, vector<1x32xf32>
    tpu.vector_store %arg20[%c0_80, %c0_81], %150 {strides = array<i32>} : memref<1x32xf32, #tpu.memory_space<vmem>>, vector<1x32xf32>,
    return
  }
  func.func @transform_0(%arg0: i32) -> (i32, i32) {
    %c0_i32 = arith.constant 0 : i32
    %c0_i32_0 = arith.constant 0 : i32
    %c0_i32_1 = arith.constant 0 : i32
    return %c0_i32, %c0_i32_0 : i32, i32
  }
  func.func @transform_1(%arg0: i32) -> (i32, i32) {
    %c0_i32 = arith.constant 0 : i32
    %c0_i32_0 = arith.constant 0 : i32
    %c0_i32_1 = arith.constant 0 : i32
    return %c0_i32, %c0_i32_0 : i32, i32
  }
  func.func @transform_2(%arg0: i32) -> (i32, i32, i32) {
    %c0_i32 = arith.constant 0 : i32
    %c0_i32_0 = arith.constant 0 : i32
    %c0_i32_1 = arith.constant 0 : i32
    %c0_i32_2 = arith.constant 0 : i32
    return %c0_i32, %c0_i32_0, %c0_i32_1 : i32, i32, i32
  }
  func.func @transform_3(%arg0: i32) -> (i32, i32) {
    %c0_i32 = arith.constant 0 : i32
    %c0_i32_0 = arith.constant 0 : i32
    %c0_i32_1 = arith.constant 0 : i32
    return %c0_i32, %c0_i32_0 : i32, i32
  }
  func.func @transform_4(%arg0: i32) -> (i32, i32) {
    %c0_i32 = arith.constant 0 : i32
    %c0_i32_0 = arith.constant 0 : i32
    %c0_i32_1 = arith.constant 0 : i32
    return %c0_i32, %c0_i32_0 : i32, i32
  }
  func.func @transform_5(%arg0: i32) -> (i32, i32) {
    %c0_i32 = arith.constant 0 : i32
    %c0_i32_0 = arith.constant 0 : i32
    %c0_i32_1 = arith.constant 0 : i32
    return %c0_i32, %c0_i32_0 : i32, i32
  }
  func.func @transform_6(%arg0: i32) -> (i32, i32) {
    %c0_i32 = arith.constant 0 : i32
    %c0_i32_0 = arith.constant 0 : i32
    %c0_i32_1 = arith.constant 0 : i32
    return %c0_i32, %c0_i32_0 : i32, i32
  }
  func.func @transform_7(%arg0: i32) -> (i32, i32) {
    %c0_i32 = arith.constant 0 : i32
    %c0_i32_0 = arith.constant 0 : i32
    %c0_i32_1 = arith.constant 0 : i32
    return %c0_i32, %c0_i32_0 : i32, i32
  }
  func.func @transform_8(%arg0: i32) -> (i32, i32) {
    %c0_i32 = arith.constant 0 : i32
    %c0_i32_0 = arith.constant 0 : i32
    %c0_i32_1 = arith.constant 0 : i32
    return %c0_i32, %c0_i32_0 : i32, i32
  }
  func.func @transform_9(%arg0: i32) -> (i32, i32) {
    %c0_i32 = arith.constant 0 : i32
    %c0_i32_0 = arith.constant 0 : i32
    %c0_i32_1 = arith.constant 0 : i32
    return %c0_i32, %c0_i32_0 : i32, i32
  }
  func.func @transform_10(%arg0: i32) -> (i32, i32) {
    %c0_i32 = arith.constant 0 : i32
    %c0_i32_0 = arith.constant 0 : i32
    %c0_i32_1 = arith.constant 0 : i32
    return %c0_i32, %c0_i32_0 : i32, i32
  }
  func.func @transform_11(%arg0: i32) -> (i32, i32) {
    %c0_i32 = arith.constant 0 : i32
    %c0_i32_0 = arith.constant 0 : i32
    %c0_i32_1 = arith.constant 0 : i32
    return %c0_i32, %c0_i32_0 : i32, i32
  }
  func.func @transform_12(%arg0: i32) -> (i32, i32, i32) {
    %c0_i32 = arith.constant 0 : i32
    %c0_i32_0 = arith.constant 0 : i32
    %c0_i32_1 = arith.constant 0 : i32
    return %arg0, %c0_i32, %c0_i32_0 : i32, i32, i32
  }
  func.func @transform_13(%arg0: i32) -> (i32, i32, i32) {
    %c0_i32 = arith.constant 0 : i32
    %c0_i32_0 = arith.constant 0 : i32
    %c0_i32_1 = arith.constant 0 : i32
    return %arg0, %c0_i32, %c0_i32_0 : i32, i32, i32
  }
}

</mosaic_0001>

<llo_original>
// kernel: speller_forward.1
$region0: #{speller_forward.1}
  #allocation0 [shape = 'u32[]', space=smem, size = 0x4, offset = 0x4, fixed_abs, tag = 'smem constant byte address 0x4 - core index']
  #allocation1 [shape = 'u32[72,128]{1,0:T(1,128)}', space=vmem, size = 0x9000, scoped, tag = 'internal scratch']
  #allocation2 [shape = 'f32[2,16]{1,0:T(2,128)}', space=vmem, size = 0x400, scoped, tag = 'scratch operand']
  #allocation3 [shape = 'f32[2,32]{1,0:T(2,128)}', space=vmem, size = 0x400, scoped, tag = 'scratch operand']
  #allocation4 [shape = 'f32[1,32]{1,0:T(1,128)}', space=vmem, size = 0x200, scoped, tag = 'scratch operand']
  #allocation5 [shape = 'f32[1,32]{1,0:T(1,128)}', space=vmem, size = 0x200, scoped, tag = 'scratch operand']
  #allocation6 [shape = 'f32[1,32]{1,0:T(1,128)}', space=vmem, size = 0x200, scoped, tag = 'scratch operand']
  #allocation7 [shape = 'f32[1,32]{1,0:T(1,128)}', space=vmem, size = 0x200, scoped, tag = 'scratch operand']
  %s0 = inlined_call_operand.vmem [shape: f32[2,16], index: 0, kind: input, shape index: {}]
  %s1 = inlined_call_operand.vmem [shape: f32[2,32], index: 1, kind: input, shape index: {}]
  %s2 = inlined_call_operand.vmem [shape: bf16[2,8,32], index: 2, kind: input, shape index: {}]
  %s3 = inlined_call_operand.hbm [shape: f32[32,32], index: 3, kind: input, shape index: {}]
  %s4 = inlined_call_operand.vmem [shape: f32[1,32], index: 4, kind: input, shape index: {}]
  %s5 = inlined_call_operand.vmem [shape: f32[48,128], index: 5, kind: input, shape index: {}]
  %s6 = inlined_call_operand.hbm [shape: f32[32,128], index: 6, kind: input, shape index: {}]
  %s7 = inlined_call_operand.vmem [shape: f32[1,128], index: 7, kind: input, shape index: {}]
  %s8 = inlined_call_operand.vmem [shape: f32[64,128], index: 8, kind: input, shape index: {}]
  %s9 = inlined_call_operand.vmem [shape: f32[1,128], index: 9, kind: input, shape index: {}]
  %s10 = inlined_call_operand.vmem [shape: f32[64,16], index: 10, kind: input, shape index: {}]
  %s11 = inlined_call_operand.vmem [shape: f32[1,16], index: 11, kind: input, shape index: {}]
  %s12 = inlined_call_operand.vmem [shape: f32[4,2,16], index: 12, kind: output, shape index: {0}]
  %s13 = inlined_call_operand.hbm [shape: f32[4,2,8], index: 13, kind: output, shape index: {1}]
  %14 = xla_tuple %s12, %s13
  %s15 = sld [smem:[#allocation0]]
  $region101: #{speller_forward.1} parent=0
    _
  %s17 = ssub.s32 1, %s15
  %s18 = scalar_select 0, %s17, %s15
  $region1: #{speller_forward.1} parent=0
    #allocation8 [shape = 'u8[16384]{0}', space=vmem, size = 0x4000, scoped, tag = 'input window, operand 3, single buffered']
    #allocation9 [shape = 's32[2]{0}', space=sflag, size = 0x8, scoped, tag = 'scoped memory for speller_forward.1']
    #allocation10 [shape = 's32[2]{0}', space=sflag, size = 0x8, scoped, tag = 'scoped memory for speller_forward.1']
    #allocation11 [shape = 'u8[16384]{0}', space=vmem, size = 0x4000, scoped, tag = 'input window, operand 6, single buffered']
    #allocation12 [shape = 's32[1]{0}', space=sflag, size = 0x4, scoped, tag = 'scoped memory for speller_forward.1']
    #allocation13 [shape = 'u8[2048]{0}', space=vmem, size = 0x800, scoped, tag = 'output window, operand 1']
    %19 = vsyncpa [#allocation9], 0
    %20 = vsyncpa [#allocation12], 0
    %21 = vsyncpa [#allocation10], 0
    %s22 = scalar_lea.sflag [#allocation10], 1
    %23 = vsyncpa %s22, 0
    loop: start=0, step=1, limit=6
    $region2: #{speller_forward.1} parent=1 // loop_pre_header
      _
    $region3: #{speller_forward.1} parent=1 // loop_header
      %s25 = sphi 0, %s29
      %p26 = scmp.ge.s32.totalorder %s25, 6
      %s33 = sphi 0, %s33
      %s35 = sphi 0, %s33
      %s36 = sphi 0, %s35
      %s50 = sphi 0, %s36
      %s54 = sphi 0, %s54
      %s56 = sphi 0, %s54
      %s57 = sphi 0, %s56
      %s71 = sphi 0, %s57
      %s75 = sphi 0, %s75
      %s77 = sphi 0, %s75
      %s78 = sphi 0, %s77
      %s92 = sphi 0, %s78
      %s96 = sphi 0, %s96
      %s98 = sphi 0, %s96
      %s99 = sphi 0, %s98
      %s113 = sphi 0, %s99
      %s117 = sphi 0, %s117
      %s119 = sphi 0, %s117
      %s120 = sphi 0, %s119
      %s134 = sphi 0, %s120
      %s138 = sphi 0, %s138
      %s140 = sphi 0, %s138
      %s141 = sphi 0, %s140
      %s155 = sphi 0, %s141
      %s159 = sphi 0, %s159
      %s161 = sphi 0, %s159
      %s162 = sphi 0, %s161
      %s176 = sphi 0, %s162
      %s180 = sphi 0, %s180
      %s182 = sphi 0, %s180
      %s183 = sphi 0, %s182
      %s197 = sphi 0, %s183
      %s201 = sphi 0, %s201
      %s203 = sphi 0, %s201
      %s204 = sphi 0, %s203
      %s218 = sphi 0, %s204
      %s222 = sphi 0, %s222
      %s224 = sphi 0, %s222
      %s225 = sphi 0, %s224
      %s239 = sphi 0, %s225
      %s243 = sphi 0, %s243
      %s245 = sphi 0, %s243
      %s246 = sphi 0, %s245
      %s260 = sphi 0, %s246
      %s264 = sphi 0, %s264
      %s266 = sphi 0, %s264
      %s267 = sphi 0, %s266
      %s281 = sphi 0, %s267
      %s287 = sphi 0, %s289
      %s290 = sphi 0, %s287
      %s291 = sphi 0, %s290
      %s307 = sphi 0, %s291
      %s313 = sphi 0, %s315
      %s316 = sphi 0, %s313
      %s317 = sphi 0, %s316
      %s333 = sphi 0, %s317
    $region4: #{speller_forward.1} parent=1 // loop_header_branch
      %28 = sbr.rel (%p26) target = $region8
    $region5: #{speller_forward.1} parent=1 // loop_body
      %s30 = ssub.s32 %s25, 1
      %s31 = ssub.s32 %s25, 2
      %s32 = sadd.s32 %s25, 1
      %s34 = sadd.s32 %s33, 1
      %p37 = scmp.eq.s32.totalorder %s25, 3
      %p38 = scmp.ne.s32.totalorder %s33, %s35
      %p39 = scmp.eq.s32.totalorder %s25, 0
      %p40 = por %p38, %p39
      %p41 = scmp.ne.s32.totalorder %s33, %s35
      %p42 = scmp.eq.s32.totalorder %s30, 3
      %p43 = por %p41, %p42
      %p44 = scmp.ne.s32.totalorder %s35, %s36
      %p45 = scmp.eq.s32.totalorder %s30, 0
      %p46 = por %p44, %p45
      %p47 = scmp.ne.s32.totalorder %s35, %s36
      %p48 = scmp.eq.s32.totalorder %s31, 3
      %p49 = por %p47, %p48
      %p51 = scmp.ne.s32.totalorder %s36, %s50
      %p52 = scmp.eq.s32.totalorder %s31, 0
      %p53 = por %p51, %p52
      %s55 = sadd.s32 %s54, 1
      %p58 = scmp.eq.s32.totalorder %s25, 3
      %p59 = scmp.ne.s32.totalorder %s54, %s56
      %p60 = scmp.eq.s32.totalorder %s25, 0
      %p61 = por %p59, %p60
      %p62 = scmp.ne.s32.totalorder %s54, %s56
      %p63 = scmp.eq.s32.totalorder %s30, 3
      %p64 = por %p62, %p63
      %p65 = scmp.ne.s32.totalorder %s56, %s57
      %p66 = scmp.eq.s32.totalorder %s30, 0
      %p67 = por %p65, %p66
      %p68 = scmp.ne.s32.totalorder %s56, %s57
      %p69 = scmp.eq.s32.totalorder %s31, 3
      %p70 = por %p68, %p69
      %p72 = scmp.ne.s32.totalorder %s57, %s71
      %p73 = scmp.eq.s32.totalorder %s31, 0
      %p74 = por %p72, %p73
      %s76 = sadd.s32 %s75, 1
      %p79 = scmp.eq.s32.totalorder %s25, 3
      %p80 = scmp.ne.s32.totalorder %s75, %s77
      %p81 = scmp.eq.s32.totalorder %s25, 0
      %p82 = por %p80, %p81
      %p83 = scmp.ne.s32.totalorder %s75, %s77
      %p84 = scmp.eq.s32.totalorder %s30, 3
      %p85 = por %p83, %p84
      %p86 = scmp.ne.s32.totalorder %s77, %s78
      %p87 = scmp.eq.s32.totalorder %s30, 0
      %p88 = por %p86, %p87
      %p89 = scmp.ne.s32.totalorder %s77, %s78
      %p90 = scmp.eq.s32.totalorder %s31, 3
      %p91 = por %p89, %p90
      %p93 = scmp.ne.s32.totalorder %s78, %s92
      %p94 = scmp.eq.s32.totalorder %s31, 0
      %p95 = por %p93, %p94
      %s97 = sadd.s32 %s96, 1
      %p100 = scmp.eq.s32.totalorder %s25, 3
      %p101 = scmp.ne.s32.totalorder %s96, %s98
      %p102 = scmp.eq.s32.totalorder %s25, 0
      %p103 = por %p101, %p102
      %p104 = scmp.ne.s32.totalorder %s96, %s98
      %p105 = scmp.eq.s32.totalorder %s30, 3
      %p106 = por %p104, %p105
      %p107 = scmp.ne.s32.totalorder %s98, %s99
      %p108 = scmp.eq.s32.totalorder %s30, 0
      %p109 = por %p107, %p108
      %p110 = scmp.ne.s32.totalorder %s98, %s99
      %p111 = scmp.eq.s32.totalorder %s31, 3
      %p112 = por %p110, %p111
      %p114 = scmp.ne.s32.totalorder %s99, %s113
      %p115 = scmp.eq.s32.totalorder %s31, 0
      %p116 = por %p114, %p115
      %s118 = sadd.s32 %s117, 1
      %p121 = scmp.eq.s32.totalorder %s25, 3
      %p122 = scmp.ne.s32.totalorder %s117, %s119
      %p123 = scmp.eq.s32.totalorder %s25, 0
      %p124 = por %p122, %p123
      %p125 = scmp.ne.s32.totalorder %s117, %s119
      %p126 = scmp.eq.s32.totalorder %s30, 3
      %p127 = por %p125, %p126
      %p128 = scmp.ne.s32.totalorder %s119, %s120
      %p129 = scmp.eq.s32.totalorder %s30, 0
      %p130 = por %p128, %p129
      %p131 = scmp.ne.s32.totalorder %s119, %s120
      %p132 = scmp.eq.s32.totalorder %s31, 3
      %p133 = por %p131, %p132
      %p135 = scmp.ne.s32.totalorder %s120, %s134
      %p136 = scmp.eq.s32.totalorder %s31, 0
      %p137 = por %p135, %p136
      %s139 = sadd.s32 %s138, 1
      %p142 = scmp.eq.s32.totalorder %s25, 3
      %p143 = scmp.ne.s32.totalorder %s138, %s140
      %p144 = scmp.eq.s32.totalorder %s25, 0
      %p145 = por %p143, %p144
      %p146 = scmp.ne.s32.totalorder %s138, %s140
      %p147 = scmp.eq.s32.totalorder %s30, 3
      %p148 = por %p146, %p147
      %p149 = scmp.ne.s32.totalorder %s140, %s141
      %p150 = scmp.eq.s32.totalorder %s30, 0
      %p151 = por %p149, %p150
      %p152 = scmp.ne.s32.totalorder %s140, %s141
      %p153 = scmp.eq.s32.totalorder %s31, 3
      %p154 = por %p152, %p153
      %p156 = scmp.ne.s32.totalorder %s141, %s155
      %p157 = scmp.eq.s32.totalorder %s31, 0
      %p158 = por %p156, %p157
      %s160 = sadd.s32 %s159, 1
      %p163 = scmp.eq.s32.totalorder %s25, 3
      %p164 = scmp.ne.s32.totalorder %s159, %s161
      %p165 = scmp.eq.s32.totalorder %s25, 0
      %p166 = por %p164, %p165
      %p167 = scmp.ne.s32.totalorder %s159, %s161
      %p168 = scmp.eq.s32.totalorder %s30, 3
      %p169 = por %p167, %p168
      %p170 = scmp.ne.s32.totalorder %s161, %s162
      %p171 = scmp.eq.s32.totalorder %s30, 0
      %p172 = por %p170, %p171
      %p173 = scmp.ne.s32.totalorder %s161, %s162
      %p174 = scmp.eq.s32.totalorder %s31, 3
      %p175 = por %p173, %p174
      %p177 = scmp.ne.s32.totalorder %s162, %s176
      %p178 = scmp.eq.s32.totalorder %s31, 0
      %p179 = por %p177, %p178
      %s181 = sadd.s32 %s180, 1
      %p184 = scmp.eq.s32.totalorder %s25, 3
      %p185 = scmp.ne.s32.totalorder %s180, %s182
      %p186 = scmp.eq.s32.totalorder %s25, 0
      %p187 = por %p185, %p186
      %p188 = scmp.ne.s32.totalorder %s180, %s182
      %p189 = scmp.eq.s32.totalorder %s30, 3
      %p190 = por %p188, %p189
      %p191 = scmp.ne.s32.totalorder %s182, %s183
      %p192 = scmp.eq.s32.totalorder %s30, 0
      %p193 = por %p191, %p192
      %p194 = scmp.ne.s32.totalorder %s182, %s183
      %p195 = scmp.eq.s32.totalorder %s31, 3
      %p196 = por %p194, %p195
      %p198 = scmp.ne.s32.totalorder %s183, %s197
      %p199 = scmp.eq.s32.totalorder %s31, 0
      %p200 = por %p198, %p199
      %s202 = sadd.s32 %s201, 1
      %p205 = scmp.eq.s32.totalorder %s25, 3
      %p206 = scmp.ne.s32.totalorder %s201, %s203
      %p207 = scmp.eq.s32.totalorder %s25, 0
      %p208 = por %p206, %p207
      %p209 = scmp.ne.s32.totalorder %s201, %s203
      %p210 = scmp.eq.s32.totalorder %s30, 3
      %p211 = por %p209, %p210
      %p212 = scmp.ne.s32.totalorder %s203, %s204
      %p213 = scmp.eq.s32.totalorder %s30, 0
      %p214 = por %p212, %p213
      %p215 = scmp.ne.s32.totalorder %s203, %s204
      %p216 = scmp.eq.s32.totalorder %s31, 3
      %p217 = por %p215, %p216
      %p219 = scmp.ne.s32.totalorder %s204, %s218
      %p220 = scmp.eq.s32.totalorder %s31, 0
      %p221 = por %p219, %p220
      %s223 = sadd.s32 %s222, 1
      %p226 = scmp.eq.s32.totalorder %s25, 3
      %p227 = scmp.ne.s32.totalorder %s222, %s224
      %p228 = scmp.eq.s32.totalorder %s25, 0
      %p229 = por %p227, %p228
      %p230 = scmp.ne.s32.totalorder %s222, %s224
      %p231 = scmp.eq.s32.totalorder %s30, 3
      %p232 = por %p230, %p231
      %p233 = scmp.ne.s32.totalorder %s224, %s225
      %p234 = scmp.eq.s32.totalorder %s30, 0
      %p235 = por %p233, %p234
      %p236 = scmp.ne.s32.totalorder %s224, %s225
      %p237 = scmp.eq.s32.totalorder %s31, 3
      %p238 = por %p236, %p237
      %p240 = scmp.ne.s32.totalorder %s225, %s239
      %p241 = scmp.eq.s32.totalorder %s31, 0
      %p242 = por %p240, %p241
      %s244 = sadd.s32 %s243, 1
      %p247 = scmp.eq.s32.totalorder %s25, 3
      %p248 = scmp.ne.s32.totalorder %s243, %s245
      %p249 = scmp.eq.s32.totalorder %s25, 0
      %p250 = por %p248, %p249
      %p251 = scmp.ne.s32.totalorder %s243, %s245
      %p252 = scmp.eq.s32.totalorder %s30, 3
      %p253 = por %p251, %p252
      %p254 = scmp.ne.s32.totalorder %s245, %s246
      %p255 = scmp.eq.s32.totalorder %s30, 0
      %p256 = por %p254, %p255
      %p257 = scmp.ne.s32.totalorder %s245, %s246
      %p258 = scmp.eq.s32.totalorder %s31, 3
      %p259 = por %p257, %p258
      %p261 = scmp.ne.s32.totalorder %s246, %s260
      %p262 = scmp.eq.s32.totalorder %s31, 0
      %p263 = por %p261, %p262
      %s265 = sadd.s32 %s264, 1
      %p268 = scmp.eq.s32.totalorder %s25, 3
      %p269 = scmp.ne.s32.totalorder %s264, %s266
      %p270 = scmp.eq.s32.totalorder %s25, 0
      %p271 = por %p269, %p270
      %p272 = scmp.ne.s32.totalorder %s264, %s266
      %p273 = scmp.eq.s32.totalorder %s30, 3
      %p274 = por %p272, %p273
      %p275 = scmp.ne.s32.totalorder %s266, %s267
      %p276 = scmp.eq.s32.totalorder %s30, 0
      %p277 = por %p275, %p276
      %p278 = scmp.ne.s32.totalorder %s266, %s267
      %p279 = scmp.eq.s32.totalorder %s31, 3
      %p280 = por %p278, %p279
      %p282 = scmp.ne.s32.totalorder %s267, %s281
      %p283 = scmp.eq.s32.totalorder %s31, 0
      %p284 = por %p282, %p283
      %s285 = ssub.s32 %s25, %s32
      %p286 = scmp.eq.s32.totalorder %s285, 0
      %s288 = sadd.s32 %s287, 1
      %s289 = scalar_select %p286, %s287, %s288
      %p292 = pneg %p286
      %p293 = scmp.eq.s32.totalorder %s25, 3
      %p294 = por %p292, %p293
      %p295 = scmp.ne.s32.totalorder %s287, %s290
      %p296 = scmp.eq.s32.totalorder %s25, 0
      %p297 = por %p295, %p296
      %p298 = scmp.ne.s32.totalorder %s287, %s290
      %p299 = scmp.eq.s32.totalorder %s30, 3
      %p300 = por %p298, %p299
      %p301 = scmp.ne.s32.totalorder %s290, %s291
      %p302 = scmp.eq.s32.totalorder %s30, 0
      %p303 = por %p301, %p302
      %p304 = scmp.ne.s32.totalorder %s290, %s291
      %p305 = scmp.eq.s32.totalorder %s31, 3
      %p306 = por %p304, %p305
      %p308 = scmp.ne.s32.totalorder %s291, %s307
      %p309 = scmp.eq.s32.totalorder %s31, 0
      %p310 = por %p308, %p309
      %s311 = ssub.s32 %s25, %s32
      %p312 = scmp.eq.s32.totalorder %s311, 0
      %s314 = sadd.s32 %s313, 1
      %s315 = scalar_select %p312, %s313, %s314
      %p318 = pneg %p312
      %p319 = scmp.eq.s32.totalorder %s25, 3
      %p320 = por %p318, %p319
      %p321 = scmp.ne.s32.totalorder %s313, %s316
      %p322 = scmp.eq.s32.totalorder %s25, 0
      %p323 = por %p321, %p322
      %p324 = scmp.ne.s32.totalorder %s313, %s316
      %p325 = scmp.eq.s32.totalorder %s30, 3
      %p326 = por %p324, %p325
      %p327 = scmp.ne.s32.totalorder %s316, %s317
      %p328 = scmp.eq.s32.totalorder %s30, 0
      %p329 = por %p327, %p328
      %p330 = scmp.ne.s32.totalorder %s316, %s317
      %p331 = scmp.eq.s32.totalorder %s31, 3
      %p332 = por %p330, %p331
      %p334 = scmp.ne.s32.totalorder %s317, %s333
      %p335 = scmp.eq.s32.totalorder %s31, 0
      %p336 = por %p334, %p335
      %p337 = scmp.le.s32.totalorder 1, %s25
      %p338 = scmp.lt.s32.totalorder %s25, 5
      %p339 = pnand %p337, %p338
      %p340 = pneg %p339
      // Predicated region
      $region9: #{speller_forward.1} parent=5 // pred_check
        _
      $region10: #{speller_forward.1} parent=5 // pred_check_branch
        %342 = sbr.rel (%p339) target = $region12
      $region11: #{speller_forward.1} parent=5 // pred_region
        %s343 = ssub.s32 %s25, 1
        // Predicated region
        $region13: #{speller_forward.1} parent=11 // pred_check
          %p344 = pneg %p46
        $region14: #{speller_forward.1} parent=11 // pred_check_branch
          %346 = sbr.rel (%p344) target = $region16
        $region15: #{speller_forward.1} parent=11 // pred_region
          _
        $region16: #{speller_forward.1} parent=11 // pred_fallthru
          _
        // Predicated region
        $region17: #{speller_forward.1} parent=11 // pred_check
          %p347 = pneg %p67
        $region18: #{speller_forward.1} parent=11 // pred_check_branch
          %349 = sbr.rel (%p347) target = $region20
        $region19: #{speller_forward.1} parent=11 // pred_region
          _
        $region20: #{speller_forward.1} parent=11 // pred_fallthru
          _
        // Predicated region
        $region21: #{speller_forward.1} parent=11 // pred_check
          %p350 = pneg %p88
        $region22: #{speller_forward.1} parent=11 // pred_check_branch
          %352 = sbr.rel (%p350) target = $region24
        $region23: #{speller_forward.1} parent=11 // pred_region
          _
        $region24: #{speller_forward.1} parent=11 // pred_fallthru
          _
        // Predicated region
        $region25: #{speller_forward.1} parent=11 // pred_check
          %p353 = pneg %p109
        $region26: #{speller_forward.1} parent=11 // pred_check_branch
          %355 = sbr.rel (%p353) target = $region28
        $region27: #{speller_forward.1} parent=11 // pred_region
          %357 = vsyncadd [#allocation9], 0
          %s358 = sshll.u32 %s3, 4
          %s359 = int_to_ptr.hbm [resolvable:$true] %s358
          %s360 = sshll.u32 [#allocation8], 4
          %s361 = int_to_ptr.vmem [resolvable:$true] %s360
          %366 = dma.hbm_to_vmem [thread:$0]  %s359, 512, %s361, [#allocation9], 128, 128, 8
        $region28: #{speller_forward.1} parent=11 // pred_fallthru
          _
        // Predicated region
        $region29: #{speller_forward.1} parent=11 // pred_check
          %p367 = pneg %p130
        $region30: #{speller_forward.1} parent=11 // pred_check_branch
          %369 = sbr.rel (%p367) target = $region32
        $region31: #{speller_forward.1} parent=11 // pred_region
          _
        $region32: #{speller_forward.1} parent=11 // pred_fallthru
          _
        // Predicated region
        $region33: #{speller_forward.1} parent=11 // pred_check
          %p370 = pneg %p151
        $region34: #{speller_forward.1} parent=11 // pred_check_branch
          %372 = sbr.rel (%p370) target = $region36
        $region35: #{speller_forward.1} parent=11 // pred_region
          _
        $region36: #{speller_forward.1} parent=11 // pred_fallthru
          _
        // Predicated region
        $region37: #{speller_forward.1} parent=11 // pred_check
          %p373 = pneg %p172
        $region38: #{speller_forward.1} parent=11 // pred_check_branch
          %375 = sbr.rel (%p373) target = $region40
        $region39: #{speller_forward.1} parent=11 // pred_region
          %377 = vsyncadd [#allocation12], 0
          %s378 = sshll.u32 %s6, 4
          %s379 = int_to_ptr.hbm [resolvable:$true] %s378
          %s380 = sshll.u32 [#allocation11], 4
          %s381 = int_to_ptr.vmem [resolvable:$true] %s380
          %386 = dma.hbm_to_vmem [thread:$0]  %s379, 512, %s381, [#allocation12], 128, 128, 8
        $region40: #{speller_forward.1} parent=11 // pred_fallthru
          _
        // Predicated region
        $region41: #{speller_forward.1} parent=11 // pred_check
          %p387 = pneg %p193
        $region42: #{speller_forward.1} parent=11 // pred_check_branch
          %389 = sbr.rel (%p387) target = $region44
        $region43: #{speller_forward.1} parent=11 // pred_region
          _
        $region44: #{speller_forward.1} parent=11 // pred_fallthru
          _
        // Predicated region
        $region45: #{speller_forward.1} parent=11 // pred_check
          %p390 = pneg %p214
        $region46: #{speller_forward.1} parent=11 // pred_check_branch
          %392 = sbr.rel (%p390) target = $region48
        $region47: #{speller_forward.1} parent=11 // pred_region
          _
        $region48: #{speller_forward.1} parent=11 // pred_fallthru
          _
        // Predicated region
        $region49: #{speller_forward.1} parent=11 // pred_check
          %p393 = pneg %p235
        $region50: #{speller_forward.1} parent=11 // pred_check_branch
          %395 = sbr.rel (%p393) target = $region52
        $region51: #{speller_forward.1} parent=11 // pred_region
          _
        $region52: #{speller_forward.1} parent=11 // pred_fallthru
          _
        // Predicated region
        $region53: #{speller_forward.1} parent=11 // pred_check
          %p396 = pneg %p256
        $region54: #{speller_forward.1} parent=11 // pred_check_branch
          %398 = sbr.rel (%p396) target = $region56
        $region55: #{speller_forward.1} parent=11 // pred_region
          _
        $region56: #{speller_forward.1} parent=11 // pred_fallthru
          _
        // Predicated region
        $region57: #{speller_forward.1} parent=11 // pred_check
          %p399 = pneg %p277
        $region58: #{speller_forward.1} parent=11 // pred_check_branch
          %401 = sbr.rel (%p399) target = $region60
        $region59: #{speller_forward.1} parent=11 // pred_region
          _
        $region60: #{speller_forward.1} parent=11 // pred_fallthru
          _
      $region12: #{speller_forward.1} parent=5 // pred_fallthru
        _
      %p402 = scmp.lt.s32.totalorder %s25, 4
      // Predicated region
      $region61: #{speller_forward.1} parent=5 // pred_check
        %p403 = pneg %p402
      $region62: #{speller_forward.1} parent=5 // pred_check_branch
        %405 = sbr.rel (%p403) target = $region64
      $region63: #{speller_forward.1} parent=5 // pred_region
        _
      $region64: #{speller_forward.1} parent=5 // pred_fallthru
        _
      %p406 = scmp.le.s32.totalorder 1, %s25
      %p407 = scmp.lt.s32.totalorder %s25, 5
      %p408 = pnand %p406, %p407
      %p409 = pneg %p408
      // Predicated region
      $region65: #{speller_forward.1} parent=5 // pred_check
        _
      $region66: #{speller_forward.1} parent=5 // pred_check_branch
        %411 = sbr.rel (%p408) target = $region68
      $region67: #{speller_forward.1} parent=5 // pred_region
        %s412 = ssub.s32 %s25, 1
        // Predicated region
        $region69: #{speller_forward.1} parent=67 // pred_check
          %p413 = pneg %p109
        $region70: #{speller_forward.1} parent=67 // pred_check_branch
          %415 = sbr.rel (%p413) target = $region72
        $region71: #{speller_forward.1} parent=67 // pred_region
          %417 = dma.done [#allocation9], 512
        $region72: #{speller_forward.1} parent=67 // pred_fallthru
          _
        // Predicated region
        $region73: #{speller_forward.1} parent=67 // pred_check
          %p418 = pneg %p172
        $region74: #{speller_forward.1} parent=67 // pred_check_branch
          %420 = sbr.rel (%p418) target = $region76
        $region75: #{speller_forward.1} parent=67 // pred_region
          %422 = dma.done [#allocation12], 512
        $region76: #{speller_forward.1} parent=67 // pred_fallthru
          _
        %p423 = pneg %p46
        %p424 = pneg %p43
        %p425 = pneg %p67
        %p426 = pneg %p64
        %p427 = pneg %p88
        %p428 = pneg %p85
        %p429 = pneg %p109
        %p430 = pneg %p106
        %p431 = pneg %p130
        %p432 = pneg %p127
        %p433 = pneg %p151
        %p434 = pneg %p148
        %p435 = pneg %p172
        %p436 = pneg %p169
        %p437 = pneg %p193
        %p438 = pneg %p190
        %p439 = pneg %p214
        %p440 = pneg %p211
        %p441 = pneg %p235
        %p442 = pneg %p232
        %p443 = pneg %p256
        %p444 = pneg %p253
        %p445 = pneg %p277
        %p446 = pneg %p274
        %p447 = pneg %p303
        %p448 = pneg %p300
        %p449 = scmp.lt.s32.totalorder %s30, 3
        %s450 = scalar_select %p449, %s30, 3
        %s451 = smul.addr %s450, 2
        %s452 = scalar_lea.vmem %s12, %s451
        %p453 = pneg %p329
        %p454 = pneg %p326
        %s455 = sand.u32 %s316, 1
        %s456 = scalar_lea.sflag [#allocation10], %s455
        %s457 = sand.u32 %s316, 1
        %s458 = smul.addr %s457, 2
        %s459 = scalar_lea.vmem [#allocation13], %s458
        %p460 = scmp.lt.s32.totalorder %s30, 3
        %s461 = scalar_select %p460, %s30, 3
        %s462 = smul.addr %s461, 2
        %s463 = scalar_lea.vmem %s12, %s462
        %p465 = scmp.eq.s32.totalorder %s30, 0
        // Predicated region
        $region77: #{speller_forward.1} parent=67 // pred_check
          %p466 = pneg %p465
        $region78: #{speller_forward.1} parent=67 // pred_check_branch
          %468 = sbr.rel (%p466) target = $region80
        $region79: #{speller_forward.1} parent=67 // pred_region
          %v469 = vld [vmem:[%s0] sm:$0x3]
          %vm470 = vcmask 123904
          %471 = vst.msk [vmem:[#allocation2] sm:$0x3] %vm470, %v469
          %v472 = vld [vmem:[%s1] sm:$0x3]
          %vm473 = vcmask 254976
          %474 = vst.msk [vmem:[#allocation3] sm:$0x3] %vm473, %v472
          %vm475 = vcmask 253952
          %476 = vst.msk [vmem:[#allocation4] sm:$0x1] %vm475, 0.0
          %477 = vst.msk [vmem:[#allocation5] sm:$0x1] %vm475, 0.0
          %478 = vst.msk [vmem:[#allocation6] sm:$0x1] %vm475, 0.0
          %479 = vst.msk [vmem:[#allocation7] sm:$0x1] %vm475, 0.0
        $region80: #{speller_forward.1} parent=67 // pred_fallthru
          _
        %v480 = vld [vmem:[#allocation8] sm:$0xff]
        %v481 = vld [vmem:[#allocation8 + $0x8] sm:$0xff]
        %v482 = vld [vmem:[#allocation8 + $0x10] sm:$0xff]
        %v483 = vld [vmem:[#allocation8 + $0x18] sm:$0xff]
        %v484 = vld [vmem:[%s4] sm:$0x1]
        %v485 = vld [vmem:[%s5] sm:$0xff]
        %v486 = vld [vmem:[%s5 + $0x8] sm:$0xff]
        %v487 = vld [vmem:[%s5 + $0x10] sm:$0xff]
        %v488 = vld [vmem:[%s5 + $0x18] sm:$0xff]
        %v489 = vld [vmem:[%s5 + $0x20] sm:$0xff]
        %v490 = vld [vmem:[%s5 + $0x28] sm:$0xff]
        %v491 = vld [vmem:[#allocation11] sm:$0xff]
        %v492 = vld [vmem:[#allocation11 + $0x8] sm:$0xff]
        %v493 = vld [vmem:[#allocation11 + $0x10] sm:$0xff]
        %v494 = vld [vmem:[#allocation11 + $0x18] sm:$0xff]
        %v495 = vld [vmem:[%s7] sm:$0x1]
        %v496 = vld [vmem:[%s8] sm:$0xff]
        %v497 = vld [vmem:[%s8 + $0x8] sm:$0xff]
        %v498 = vld [vmem:[%s8 + $0x10] sm:$0xff]
        %v499 = vld [vmem:[%s8 + $0x18] sm:$0xff]
        %v500 = vld [vmem:[%s8 + $0x20] sm:$0xff]
        %v501 = vld [vmem:[%s8 + $0x28] sm:$0xff]
        %v502 = vld [vmem:[%s8 + $0x30] sm:$0xff]
        %v503 = vld [vmem:[%s8 + $0x38] sm:$0xff]
        %v504 = vld [vmem:[%s9] sm:$0x1]
        %v505 = vld [vmem:[%s10] sm:$0xff]
        %v506 = vld [vmem:[%s10 + $0x8] sm:$0xff]
        %v507 = vld [vmem:[%s10 + $0x10] sm:$0xff]
        %v508 = vld [vmem:[%s10 + $0x18] sm:$0xff]
        %v509 = vld [vmem:[%s10 + $0x20] sm:$0xff]
        %v510 = vld [vmem:[%s10 + $0x28] sm:$0xff]
        %v511 = vld [vmem:[%s10 + $0x30] sm:$0xff]
        %v512 = vld [vmem:[%s10 + $0x38] sm:$0xff]
        %v513 = vld [vmem:[%s11] sm:$0x1]
        %v514 = vld [vmem:[%s2] sm:$0xf]
        %v515 = vld [vmem:[%s2 + $0x4] sm:$0xf]
        %v516 = vld [vmem:[#allocation2] sm:$0x3]
        %v517 = vld [vmem:[#allocation3] sm:$0x3]
        %v518 = vld [vmem:[#allocation4] sm:$0x1]
        %v519 = vld [vmem:[#allocation5] sm:$0x1]
        %v520 = vld [vmem:[#allocation6] sm:$0x1]
        %v521 = vld [vmem:[#allocation7] sm:$0x1]
        %523 = vrot.lane.b32.xlu0 %v517, 16
        %v524 = vpop.permute.xlu0 %523
        %vm526 = vcmask 130048
        %v527 = vsel %vm526, %v516, %v524
        %v529 = vperm.slane %v495, 0
        %vm531 = vcmask 392192
        %v533 = vsel %vm531, %v527, 0
        %535 = vmatpush.msra.mxu0 0.0
        %536 = vmatpush.msra.mxu0 0.0
        %537 = vmatpush.msra.mxu0 0.0
        %538 = vmatpush.msra.mxu0 0.0
        %539 = vmatpush.msra.mxu0 0.0
        %540 = vmatpush.msra.mxu0 0.0
        %541 = vmatpush.msra.mxu0 0.0
        %542 = vmatpush.msra.mxu0 0.0
        %543 = vmatpush.msra.mxu0 0.0
        %544 = vmatpush.msra.mxu0 0.0
        %545 = vmatpush.msra.mxu0 %v490
        %546 = vmatpush.msra.mxu0 %v489
        %547 = vmatpush.msra.mxu0 %v488
        %548 = vmatpush.msra.mxu0 %v487
        %549 = vmatpush.msra.mxu0 %v486
        %550 = vmatpush.msra.mxu0 %v485
        %551 = vmatmul.f32.gmra.mxu0 %v533
        %v552 = vpop.f32.mrf.mxu0
        %v553 = vadd.f32 %v529, %v552
        %554 = vdwg.mxu0
        %v555 = vlaneseq
        %v556 = vshrl.u32 %v555, 7
        %vm557 = vcmp.eq.s32.totalorder %v556, 0
        %v558 = vsel %vm557, %v553, 0.0
        %vm559 = vcmask 1041408
        %v560 = vsel %vm559, %v558, 0.0
        %v561 = vrot.slane %v560, 4
        %v562 = vadd.f32 %v560, %v561
        %v563 = vrot.slane %v562, 2
        %v564 = vadd.f32 %v562, %v563
        %v565 = vrot.slane %v564, 1
        %v566 = vadd.f32 %v564, %v565
        %vm567 = vcmask 261120
        %v569 = vsel %vm567, %v518, 0
        %571 = vmatpush.msra.mxu0 0.0
        %572 = vmatpush.msra.mxu0 0.0
        %573 = vmatpush.msra.mxu0 0.0
        %574 = vmatpush.msra.mxu0 0.0
        %575 = vmatpush.msra.mxu0 0.0
        %576 = vmatpush.msra.mxu0 0.0
        %577 = vmatpush.msra.mxu0 0.0
        %578 = vmatpush.msra.mxu0 0.0
        %579 = vmatpush.msra.mxu0 0.0
        %580 = vmatpush.msra.mxu0 0.0
        %581 = vmatpush.msra.mxu0 0.0
        %582 = vmatpush.msra.mxu0 0.0
        %583 = vmatpush.msra.mxu0 %v494
        %584 = vmatpush.msra.mxu0 %v493
        %585 = vmatpush.msra.mxu0 %v492
        %586 = vmatpush.msra.mxu0 %v491
        %587 = vmatmul.f32.gmra.mxu0 %v569
        %v588 = vpop.f32.mrf.mxu0
        %v589 = vadd.f32 0.0, %v588
        %590 = vdwg.mxu0
        %v591 = vadd.f32 %v566, %v589
        %v592 = vxor.u32 %v591, 2147483648
        %v593 = vmul.f32 %v592, 1.442695
        %v594 = vpow.pop %v593
        %v595 = vadd.f32 %v594, 1.0
        %v596 = vrcp.pop %v595
        %v597 = vmul.f32 %v595, %v596
        %v598 = vsub.f32 1.0, %v597
        %v599 = vmul.f32 %v596, %v598
        %v600 = vadd.f32 %v596, %v599
        %vm601 = vweird.f32 %v595
        %vm602 = vweird.f32 %v596
        %vm603 = vmor %vm601, %vm602
        %v604 = vsel %vm603, %v596, %v600
        %v605 = vand.u32 2147483647, %v595
        %vm606 = vcmp.eq.f32.partialorder %v605, 8.507059e+37
        %v607 = vand.u32 %v595, 2147483648
        %v608 = vor.u32 1.1754944e-38, %v607
        %v609 = vsel %vm606, %v608, %v604
        %v610 = vmul.f32 1.0, %v609
        %v611 = vtanh.pop %v591
        %v613 = vperm.slane %v519, 0
        %614 = vrot.lane.b32.xlu0 %v613, 32
        %v615 = vpop.permute.xlu0 %614
        %v617 = vmul.f32 %v610, %v615
        %619 = vrot.lane.b32.xlu0 %v611, 64
        %v620 = vpop.permute.xlu0 %619
        %v622 = vmul.f32 %v610, %v620
        %624 = vrot.lane.b32.xlu0 %v622, 32
        %v625 = vpop.permute.xlu0 %624
        %v627 = vadd.f32 %v617, %v625
        %v628 = vtanh.pop %v627
        %630 = vrot.lane.b32.xlu0 %v628, 64
        %v631 = vpop.permute.xlu0 %630
        %v633 = vmul.f32 %v610, %v631
        %635 = vrot.lane.b32.xlu0 %v633, 32
        %v636 = vpop.permute.xlu0 %635
        %v639 = vperm.slane %v520, 0
        %640 = vrot.lane.b32.xlu0 %v639, 32
        %v641 = vpop.permute.xlu0 %640
        %v643 = vsel %vm567, %v636, %v641
        %vm644 = vcmask 523264
        %v646 = vsel %vm644, %v643, 0
        %648 = vmatpush.msra.mxu0 0.0
        %649 = vmatpush.msra.mxu0 0.0
        %650 = vmatpush.msra.mxu0 0.0
        %651 = vmatpush.msra.mxu0 0.0
        %652 = vmatpush.msra.mxu0 0.0
        %653 = vmatpush.msra.mxu0 0.0
        %654 = vmatpush.msra.mxu0 0.0
        %655 = vmatpush.msra.mxu0 0.0
        %656 = vmatpush.msra.mxu0 %v503
        %657 = vmatpush.msra.mxu0 %v502
        %658 = vmatpush.msra.mxu0 %v501
        %659 = vmatpush.msra.mxu0 %v500
        %660 = vmatpush.msra.mxu0 %v499
        %661 = vmatpush.msra.mxu0 %v498
        %662 = vmatpush.msra.mxu0 %v497
        %663 = vmatpush.msra.mxu0 %v496
        %664 = vmatmul.f32.gmra.mxu0 %v646
        %v665 = vpop.f32.mrf.mxu0
        %v666 = vadd.f32 %v504, %v665
        %667 = vdwg.mxu0
        %v668 = vxor.u32 %v666, 2147483648
        %v669 = vmul.f32 %v668, 1.442695
        %v670 = vpow.pop %v669
        %v671 = vadd.f32 %v670, 1.0
        %v672 = vrcp.pop %v671
        %v673 = vmul.f32 %v671, %v672
        %v674 = vsub.f32 1.0, %v673
        %v675 = vmul.f32 %v672, %v674
        %v676 = vadd.f32 %v672, %v675
        %vm677 = vweird.f32 %v671
        %vm678 = vweird.f32 %v672
        %vm679 = vmor %vm677, %vm678
        %v680 = vsel %vm679, %v672, %v676
        %v681 = vand.u32 2147483647, %v671
        %vm682 = vcmp.eq.f32.partialorder %v681, 8.507059e+37
        %v683 = vand.u32 %v671, 2147483648
        %v684 = vor.u32 1.1754944e-38, %v683
        %v685 = vsel %vm682, %v684, %v680
        %v686 = vmul.f32 1.0, %v685
        %v687 = vtanh.pop %v666
        %v689 = vperm.slane %v521, 0
        %690 = vrot.lane.b32.xlu0 %v689, 32
        %v691 = vpop.permute.xlu0 %690
        %v693 = vmul.f32 %v686, %v691
        %695 = vrot.lane.b32.xlu0 %v687, 64
        %v696 = vpop.permute.xlu0 %695
        %v698 = vmul.f32 %v686, %v696
        %700 = vrot.lane.b32.xlu0 %v698, 32
        %v701 = vpop.permute.xlu0 %700
        %v703 = vadd.f32 %v693, %v701
        %v704 = vtanh.pop %v703
        %706 = vrot.lane.b32.xlu0 %v704, 64
        %v707 = vpop.permute.xlu0 %706
        %v709 = vmul.f32 %v686, %v707
        %v710 = vperm.slane %v709, 0
        %v711 = vsel %vm557, %v710, 0.0
        %vm712 = vcmp.eq.s32.totalorder %v556, 1
        %v713 = vsel %vm712, %v553, 0.0
        %v714 = vsel %vm559, %v713, 0.0
        %v715 = vrot.slane %v714, 4
        %v716 = vadd.f32 %v714, %v715
        %v717 = vrot.slane %v716, 2
        %v718 = vadd.f32 %v716, %v717
        %v719 = vrot.slane %v718, 1
        %v720 = vadd.f32 %v718, %v719
        %v721 = vsel %vm567, %v636, 0
        %723 = vmatpush.msra.mxu0 0.0
        %724 = vmatpush.msra.mxu0 0.0
        %725 = vmatpush.msra.mxu0 0.0
        %726 = vmatpush.msra.mxu0 0.0
        %727 = vmatpush.msra.mxu0 0.0
        %728 = vmatpush.msra.mxu0 0.0
        %729 = vmatpush.msra.mxu0 0.0
        %730 = vmatpush.msra.mxu0 0.0
        %731 = vmatpush.msra.mxu0 0.0
        %732 = vmatpush.msra.mxu0 0.0
        %733 = vmatpush.msra.mxu0 0.0
        %734 = vmatpush.msra.mxu0 0.0
        %735 = vmatpush.msra.mxu0 %v494
        %736 = vmatpush.msra.mxu0 %v493
        %737 = vmatpush.msra.mxu0 %v492
        %738 = vmatpush.msra.mxu0 %v491
        %739 = vmatmul.f32.gmra.mxu0 %v721
        %v740 = vpop.f32.mrf.mxu0
        %v741 = vadd.f32 0.0, %v740
        %742 = vdwg.mxu0
        %v743 = vadd.f32 %v720, %v741
        %v744 = vxor.u32 %v743, 2147483648
        %v745 = vmul.f32 %v744, 1.442695
        %v746 = vpow.pop %v745
        %v747 = vadd.f32 %v746, 1.0
        %v748 = vrcp.pop %v747
        %v749 = vmul.f32 %v747, %v748
        %v750 = vsub.f32 1.0, %v749
        %v751 = vmul.f32 %v748, %v750
        %v752 = vadd.f32 %v748, %v751
        %vm753 = vweird.f32 %v747
        %vm754 = vweird.f32 %v748
        %vm755 = vmor %vm753, %vm754
        %v756 = vsel %vm755, %v748, %v752
        %v757 = vand.u32 2147483647, %v747
        %vm758 = vcmp.eq.f32.partialorder %v757, 8.507059e+37
        %v759 = vand.u32 %v747, 2147483648
        %v760 = vor.u32 1.1754944e-38, %v759
        %v761 = vsel %vm758, %v760, %v756
        %v762 = vmul.f32 1.0, %v761
        %v763 = vtanh.pop %v743
        %v764 = vmul.f32 %v762, %v627
        %766 = vrot.lane.b32.xlu0 %v763, 64
        %v767 = vpop.permute.xlu0 %766
        %v769 = vmul.f32 %v762, %v767
        %771 = vrot.lane.b32.xlu0 %v769, 32
        %v772 = vpop.permute.xlu0 %771
        %v774 = vadd.f32 %v764, %v772
        %v775 = vtanh.pop %v774
        %777 = vrot.lane.b32.xlu0 %v775, 64
        %v778 = vpop.permute.xlu0 %777
        %v780 = vmul.f32 %v762, %v778
        %782 = vrot.lane.b32.xlu0 %v780, 32
        %v783 = vpop.permute.xlu0 %782
        %786 = vrot.lane.b32.xlu0 %v709, 64
        %v787 = vpop.permute.xlu0 %786
        %v789 = vsel %vm567, %v783, %v787
        %v791 = vsel %vm644, %v789, 0
        %793 = vmatpush.msra.mxu0 0.0
        %794 = vmatpush.msra.mxu0 0.0
        %795 = vmatpush.msra.mxu0 0.0
        %796 = vmatpush.msra.mxu0 0.0
        %797 = vmatpush.msra.mxu0 0.0
        %798 = vmatpush.msra.mxu0 0.0
        %799 = vmatpush.msra.mxu0 0.0
        %800 = vmatpush.msra.mxu0 0.0
        %801 = vmatpush.msra.mxu0 %v503
        %802 = vmatpush.msra.mxu0 %v502
        %803 = vmatpush.msra.mxu0 %v501
        %804 = vmatpush.msra.mxu0 %v500
        %805 = vmatpush.msra.mxu0 %v499
        %806 = vmatpush.msra.mxu0 %v498
        %807 = vmatpush.msra.mxu0 %v497
        %808 = vmatpush.msra.mxu0 %v496
        %809 = vmatmul.f32.gmra.mxu0 %v791
        %v810 = vpop.f32.mrf.mxu0
        %v811 = vadd.f32 %v504, %v810
        %812 = vdwg.mxu0
        %v813 = vxor.u32 %v811, 2147483648
        %v814 = vmul.f32 %v813, 1.442695
        %v815 = vpow.pop %v814
        %v816 = vadd.f32 %v815, 1.0
        %v817 = vrcp.pop %v816
        %v818 = vmul.f32 %v816, %v817
        %v819 = vsub.f32 1.0, %v818
        %v820 = vmul.f32 %v817, %v819
        %v821 = vadd.f32 %v817, %v820
        %vm822 = vweird.f32 %v816
        %vm823 = vweird.f32 %v817
        %vm824 = vmor %vm822, %vm823
        %v825 = vsel %vm824, %v817, %v821
        %v826 = vand.u32 2147483647, %v816
        %vm827 = vcmp.eq.f32.partialorder %v826, 8.507059e+37
        %v828 = vand.u32 %v816, 2147483648
        %v829 = vor.u32 1.1754944e-38, %v828
        %v830 = vsel %vm827, %v829, %v825
        %v831 = vmul.f32 1.0, %v830
        %v832 = vtanh.pop %v811
        %v833 = vmul.f32 %v831, %v703
        %835 = vrot.lane.b32.xlu0 %v832, 64
        %v836 = vpop.permute.xlu0 %835
        %v838 = vmul.f32 %v831, %v836
        %840 = vrot.lane.b32.xlu0 %v838, 32
        %v841 = vpop.permute.xlu0 %840
        %v843 = vadd.f32 %v833, %v841
        %v844 = vtanh.pop %v843
        %846 = vrot.lane.b32.xlu0 %v844, 64
        %v847 = vpop.permute.xlu0 %846
        %v849 = vmul.f32 %v831, %v847
        %v850 = vperm.slane %v849, 0
        %v851 = vsel %vm712, %v850, %v711
        %v853 = vperm.slane %v484, 0
        %856 = vrot.lane.b32.xlu0 %v851, 32
        %v857 = vpop.permute.xlu0 %856
        %v858 = vsel %vm567, %v857, 0
        %860 = vmatpush.msra.mxu0 0.0
        %861 = vmatpush.msra.mxu0 0.0
        %862 = vmatpush.msra.mxu0 0.0
        %863 = vmatpush.msra.mxu0 0.0
        %864 = vmatpush.msra.mxu0 0.0
        %865 = vmatpush.msra.mxu0 0.0
        %866 = vmatpush.msra.mxu0 0.0
        %867 = vmatpush.msra.mxu0 0.0
        %868 = vmatpush.msra.mxu0 0.0
        %869 = vmatpush.msra.mxu0 0.0
        %870 = vmatpush.msra.mxu0 0.0
        %871 = vmatpush.msra.mxu0 0.0
        %872 = vmatpush.msra.mxu0 %v483
        %873 = vmatpush.msra.mxu0 %v482
        %874 = vmatpush.msra.mxu0 %v481
        %875 = vmatpush.msra.mxu0 %v480
        %876 = vmatmul.f32.gmra.mxu0 %v858
        %v877 = vpop.f32.mrf.mxu0
        %v878 = vadd.f32 %v853, %v877
        %879 = vdwg.mxu0
        %v880 = vmax.f32 %v878, 0.0
        %v882 = vrot.slane %v880, 1
        %v884 = vpack.c.bf16 %v880, %v880
        %v885 = vpack.c.bf16 %v882, %v882
        %v887 = vsel %vm567, %v884, 0
        %v890 = vsel %vm567, %v514, 0
        %892 = vmatpush.bf16.xpose.msra.mxu0 0
        %893 = vmatpush.bf16.xpose.msra.mxu0 0
        %894 = vmatpush.bf16.xpose.msra.mxu0 0
        %895 = vmatpush.bf16.xpose.msra.mxu0 0
        %896 = vmatpush.bf16.xpose.msra.mxu0 0
        %897 = vmatpush.bf16.xpose.msra.mxu0 0
        %898 = vmatpush.bf16.xpose.msra.mxu0 0
        %899 = vmatpush.bf16.xpose.msra.mxu0 %v890
        %900 = vmatmul.bf16.gmra.mxu0 %v887
        %v901 = vpop.f32.mrf.mxu0
        %v902 = vadd.f32 0.0, %v901
        %v903 = vpop.f32.mrf.mxu0
        %904 = vdwg.mxu0
        %v906 = vsel %vm567, %v885, 0
        %v909 = vsel %vm567, %v515, 0
        %911 = vmatpush.bf16.xpose.msra.mxu0 0
        %912 = vmatpush.bf16.xpose.msra.mxu0 0
        %913 = vmatpush.bf16.xpose.msra.mxu0 0
        %914 = vmatpush.bf16.xpose.msra.mxu0 0
        %915 = vmatpush.bf16.xpose.msra.mxu0 0
        %916 = vmatpush.bf16.xpose.msra.mxu0 0
        %917 = vmatpush.bf16.xpose.msra.mxu0 0
        %918 = vmatpush.bf16.xpose.msra.mxu0 %v909
        %919 = vmatmul.bf16.gmra.mxu0 %v906
        %v920 = vpop.f32.mrf.mxu0
        %v921 = vadd.f32 0.0, %v920
        %v922 = vpop.f32.mrf.mxu0
        %923 = vdwg.mxu0
        %vm924 = vcmask 57344
        %v925 = vsel %vm924, %v902, -inf
        %926 = vmax.xlane.f32.xlu0 %v925
        %v927 = vpop.xlane.xlu0 %926
        %v928 = vsel %vm924, %v921, -inf
        %929 = vmax.xlane.f32.xlu0 %v928
        %v930 = vpop.xlane.xlu0 %929
        %v931 = vsub.f32 %v902, %v927
        %v932 = vsub.f32 %v921, %v930
        %v933 = vmul.f32 %v931, 1.442695
        %v934 = vpow.pop %v933
        %v935 = vmul.f32 %v932, 1.442695
        %v936 = vpow.pop %v935
        %v937 = vsel %vm924, %v934, 0.0
        %938 = vadd.xlane.f32.xlu0 %v937
        %v939 = vpop.xlane.xlu0 %938
        %v940 = vsel %vm924, %v936, 0.0
        %941 = vadd.xlane.f32.xlu0 %v940
        %v942 = vpop.xlane.xlu0 %941
        %v943 = vrcp.pop %v939
        %v944 = vmul.f32 %v939, %v943
        %v945 = vsub.f32 1.0, %v944
        %v946 = vmul.f32 %v943, %v945
        %v947 = vadd.f32 %v943, %v946
        %vm948 = vweird.f32 %v939
        %vm949 = vweird.f32 %v943
        %vm950 = vmor %vm948, %vm949
        %v951 = vsel %vm950, %v943, %v947
        %v952 = vand.u32 2147483647, %v939
        %vm953 = vcmp.eq.f32.partialorder %v952, 8.507059e+37
        %v954 = vand.u32 %v939, 2147483648
        %v955 = vor.u32 1.1754944e-38, %v954
        %v956 = vsel %vm953, %v955, %v951
        %v957 = vmul.f32 %v934, %v956
        %v958 = vrcp.pop %v942
        %v959 = vmul.f32 %v942, %v958
        %v960 = vsub.f32 1.0, %v959
        %v961 = vmul.f32 %v958, %v960
        %v962 = vadd.f32 %v958, %v961
        %vm963 = vweird.f32 %v942
        %vm964 = vweird.f32 %v958
        %vm965 = vmor %vm963, %vm964
        %v966 = vsel %vm965, %v958, %v962
        %v967 = vand.u32 2147483647, %v942
        %vm968 = vcmp.eq.f32.partialorder %v967, 8.507059e+37
        %v969 = vand.u32 %v942, 2147483648
        %v970 = vor.u32 1.1754944e-38, %v969
        %v971 = vsel %vm968, %v970, %v966
        %v972 = vmul.f32 %v936, %v971
        %v973 = vpack.c.bf16 %v957, %v957
        %v974 = vpack.c.bf16 %v972, %v972
        %vm975 = vcmask 64512
        %v977 = vsel %vm975, %v973, 0
        %vm979 = vcmask 1043456
        %v980 = vsel %vm979, %v514, 0
        %982 = vmatpush.bf16.msra.mxu0 0
        %983 = vmatpush.bf16.msra.mxu0 0
        %984 = vmatpush.bf16.msra.mxu0 0
        %985 = vmatpush.bf16.msra.mxu0 0
        %986 = vmatpush.bf16.msra.mxu0 0
        %987 = vmatpush.bf16.msra.mxu0 0
        %988 = vmatpush.bf16.msra.mxu0 0
        %989 = vmatpush.bf16.msra.mxu0 %v980
        %990 = vmatmul.bf16.gmra.mxu0 %v977
        %v991 = vpop.f32.mrf.mxu0
        %v992 = vadd.f32 0.0, %v991
        %v993 = vpop.f32.mrf.mxu0
        %994 = vdwg.mxu0
        %v996 = vsel %vm975, %v974, 0
        %v998 = vsel %vm979, %v515, 0
        %1000 = vmatpush.bf16.msra.mxu0 0
        %1001 = vmatpush.bf16.msra.mxu0 0
        %1002 = vmatpush.bf16.msra.mxu0 0
        %1003 = vmatpush.bf16.msra.mxu0 0
        %1004 = vmatpush.bf16.msra.mxu0 0
        %1005 = vmatpush.bf16.msra.mxu0 0
        %1006 = vmatpush.bf16.msra.mxu0 0
        %1007 = vmatpush.bf16.msra.mxu0 %v998
        %1008 = vmatmul.bf16.gmra.mxu0 %v996
        %v1009 = vpop.f32.mrf.mxu0
        %v1010 = vadd.f32 0.0, %v1009
        %v1011 = vpop.f32.mrf.mxu0
        %1012 = vdwg.mxu0
        %v1016 = vrot.slane %v1010, 7
        %vm1017 = vcmask 1041409
        %v1018 = vsel %vm1017, %v1016, %v992
        %1019 = vrot.lane.b32.xlu0 %v1018, 32
        %v1020 = vpop.permute.xlu0 %1019
        %v1022 = vsel %vm567, %v857, %v1020
        %v1024 = vperm.slane %v513, 0
        %v1027 = vsel %vm644, %v1022, 0
        %1029 = vmatpush.msra.mxu0 0.0
        %1030 = vmatpush.msra.mxu0 0.0
        %1031 = vmatpush.msra.mxu0 0.0
        %1032 = vmatpush.msra.mxu0 0.0
        %1033 = vmatpush.msra.mxu0 0.0
        %1034 = vmatpush.msra.mxu0 0.0
        %1035 = vmatpush.msra.mxu0 0.0
        %1036 = vmatpush.msra.mxu0 0.0
        %1037 = vmatpush.msra.mxu0 %v512
        %1038 = vmatpush.msra.mxu0 %v511
        %1039 = vmatpush.msra.mxu0 %v510
        %1040 = vmatpush.msra.mxu0 %v509
        %1041 = vmatpush.msra.mxu0 %v508
        %1042 = vmatpush.msra.mxu0 %v507
        %1043 = vmatpush.msra.mxu0 %v506
        %1044 = vmatpush.msra.mxu0 %v505
        %1045 = vmatmul.f32.gmra.mxu0 %v1027
        %v1046 = vpop.f32.mrf.mxu0
        %v1047 = vadd.f32 %v1024, %v1046
        %1048 = vdwg.mxu0
        %vm1049 = vcmask 123904
        %v1050 = vsel %vm1049, %v1047, -inf
        %1051 = vmax.xlane.f32.xlu0 %v1050
        %v1052 = vpop.xlane.xlu0 %1051
        %v1053 = vsub.f32 %v1047, %v1052
        %v1054 = vmul.f32 %v1053, 1.442695
        %v1055 = vpow.pop %v1054
        %v1056 = vsel %vm1049, %v1055, 0.0
        %1057 = vadd.xlane.f32.xlu0 %v1056
        %v1058 = vpop.xlane.xlu0 %1057
        %v1059 = vlog2.pop %v1058
        %v1060 = vmul.f32 %v1059, 0.6931472
        %v1061 = vsub.f32 %v1053, %v1060
        %1062 = vst.msk [vmem:[%s463] sm:$0x3] %vm1049, %v1061
        %v1065 = vrot.slane %v972, 7
        %v1066 = vsel %vm1017, %v1065, %v957
        %vm1068 = vcmask 58368
        %1069 = vst.msk [vmem:[%s459] sm:$0x3] %vm1068, %v1066
        %1070 = vst.msk [vmem:[#allocation2] sm:$0x3] %vm1049, %v1061
        %vm1072 = vcmask 254976
        %1073 = vst.msk [vmem:[#allocation3] sm:$0x3] %vm1072, %v1018
        %vm1074 = vcmask 253952
        %1075 = vst.msk [vmem:[#allocation4] sm:$0x1] %vm1074, %v783
        %1077 = vrot.lane.b32.xlu0 %v774, 96
        %v1078 = vpop.permute.xlu0 %1077
        %1080 = vst.msk [vmem:[#allocation5] sm:$0x1] %vm1074, %v1078
        %1082 = vrot.lane.b32.xlu0 %v849, 32
        %v1083 = vpop.permute.xlu0 %1082
        %1085 = vst.msk [vmem:[#allocation6] sm:$0x1] %vm1074, %v1083
        %1087 = vrot.lane.b32.xlu0 %v843, 96
        %v1088 = vpop.permute.xlu0 %1087
        %1090 = vst.msk [vmem:[#allocation7] sm:$0x1] %vm1074, %v1088
        %p1091 = scmp.lt.s32.totalorder %s30, 3
        %s1092 = scalar_select %p1091, %s30, 3
        %s1093 = smul.addr %s1092, 2
        %s1094 = scalar_lea.vmem %s12, %s1093
        %s1095 = sand.u32 %s316, 1
        %s1096 = scalar_lea.sflag [#allocation10], %s1095
        %s1097 = sand.u32 %s316, 1
        %s1098 = smul.addr %s1097, 2
        %s1099 = scalar_lea.vmem [#allocation13], %s1098
        // Predicated region
        $region81: #{speller_forward.1} parent=67 // pred_check
          %p1100 = pneg %p300
        $region82: #{speller_forward.1} parent=67 // pred_check_branch
          %1102 = sbr.rel (%p1100) target = $region84
        $region83: #{speller_forward.1} parent=67 // pred_region
          _
        $region84: #{speller_forward.1} parent=67 // pred_fallthru
          _
        // Predicated region
        $region85: #{speller_forward.1} parent=67 // pred_check
          %p1103 = pneg %p326
        $region86: #{speller_forward.1} parent=67 // pred_check_branch
          %1105 = sbr.rel (%p1103) target = $region88
        $region87: #{speller_forward.1} parent=67 // pred_region
          %1107 = vsyncadd %s1096, 0
          %s1108 = smul.addr %s30, 2
          %s1109 = scalar_lea.hbm %s13, %s1108
          %s1111 = sshll.u32 %s1099, 4
          %s1112 = int_to_ptr.vmem [resolvable:$true] %s1111
          %s1113 = sshll.u32 %s1109, 4
          %s1114 = int_to_ptr.hbm [resolvable:$true] %s1113
          %1116 = dma.vmem_to_hbm [thread:$0]  %s1112, 32, %s1114, %s1096
        $region88: #{speller_forward.1} parent=67 // pred_fallthru
          _
      $region68: #{speller_forward.1} parent=5 // pred_fallthru
        _
      %p1117 = scmp.le.s32.totalorder 2, %s25
      // Predicated region
      $region89: #{speller_forward.1} parent=5 // pred_check
        %p1118 = pneg %p1117
      $region90: #{speller_forward.1} parent=5 // pred_check_branch
        %1120 = sbr.rel (%p1118) target = $region92
      $region91: #{speller_forward.1} parent=5 // pred_region
        %s1121 = ssub.s32 %s25, 2
        // Predicated region
        $region93: #{speller_forward.1} parent=91 // pred_check
          %p1122 = pneg %p306
        $region94: #{speller_forward.1} parent=91 // pred_check_branch
          %1124 = sbr.rel (%p1122) target = $region96
        $region95: #{speller_forward.1} parent=91 // pred_region
          %p1125 = scmp.lt.s32.totalorder %s31, 3
          %s1126 = scalar_select %p1125, %s31, 3
          %s1127 = smul.addr %s1126, 2
          %s1128 = scalar_lea.vmem %s12, %s1127
        $region96: #{speller_forward.1} parent=91 // pred_fallthru
          _
        // Predicated region
        $region97: #{speller_forward.1} parent=91 // pred_check
          %p1129 = pneg %p332
        $region98: #{speller_forward.1} parent=91 // pred_check_branch
          %1131 = sbr.rel (%p1129) target = $region100
        $region99: #{speller_forward.1} parent=91 // pred_region
          %s1132 = sand.u32 %s317, 1
          %s1133 = scalar_lea.sflag [#allocation10], %s1132
          %s1134 = sand.u32 %s317, 1
          %s1135 = smul.addr %s1134, 2
          %s1136 = scalar_lea.vmem [#allocation13], %s1135
          %1138 = dma.done %s1133, 32
        $region100: #{speller_forward.1} parent=91 // pred_fallthru
          _
      $region92: #{speller_forward.1} parent=5 // pred_fallthru
        _
    $region6: #{speller_forward.1} parent=1 // loop_footer
      %s29 = sadd.s32 1, %s25
    $region7: #{speller_forward.1} parent=1 // loop_footer_branch
      %24 = sbr.rel target = $region3
    $region8: #{speller_forward.1} parent=1 // loop_exit
      _
    %1139 = vsyncpa [#allocation9], 1
    %s1140 = scalar_lea.sflag [#allocation9], 1
    %1141 = vsyncpa %s1140, 1
    %1142 = vsyncpa [#allocation12], 1
    %1143 = vsyncpa [#allocation10], 1
    %s1144 = scalar_lea.sflag [#allocation10], 1
    %1145 = vsyncpa %s1144, 1

</llo_original>
